<compile_context>
chip_gen: v7x
topology: tpu7x:2x2x1
jax: 0.10.0
libtpu: 0.0.40
codegen_flags: <defaults>
</compile_context>

<pallas_src>
import functools
import math

import jax
import jax.numpy as jnp
from jax.experimental import pallas as pl
from jax.experimental.pallas import tpu as pltpu

LN_EPS = 1e-5


def mha_kernel(q_ref, k_ref, v_ref,
               wq_ref, bq_ref, wk_ref, bk_ref, wv_ref, bv_ref,
               wo_ref, bo_ref, gamma_ref, beta_ref,
               out_ref, ctx_ref, *, n_heads: int, d_k: int):
    # Blocks: q/k/v/out are (1, S, D) per grid step (one batch element); weights are the
    # original nn.Linear (D_out, D_in) layout in bf16; biases / LN params are (1, D) f32.
    q_res = q_ref[0]                                    # (S, D) f32, residual input
    S, D = q_res.shape
    scale = 1.0 / math.sqrt(d_k)

    # y = x @ W.T expressed as a dot_general contracting both operands' last dim
    # (no transposed weight copy is ever materialized).
    cdims = (((1,), (1,)), ((), ()))

    q_bf = q_res.astype(jnp.bfloat16)
    k_bf = k_ref[0].astype(jnp.bfloat16)
    v_bf = v_ref[0].astype(jnp.bfloat16)

    # QKV projections: bf16 MXU operands, f32 accumulation, f32 bias add.
    Q = jax.lax.dot_general(q_bf, wq_ref[...], cdims,
                            preferred_element_type=jnp.float32) + bq_ref[...]
    K = jax.lax.dot_general(k_bf, wk_ref[...], cdims,
                            preferred_element_type=jnp.float32) + bk_ref[...]
    V = jax.lax.dot_general(v_bf, wv_ref[...], cdims,
                            preferred_element_type=jnp.float32) + bv_ref[...]

    # Head-major (H, S, d_k) stacks built from contiguous lane slices; the attention matmuls
    # below are then single batched contractions over the head axis instead of H unrolled
    # (S,d_k)x(d_k,S) matmuls.
    Qh = jnp.stack([Q[:, h * d_k:(h + 1) * d_k] for h in range(n_heads)],
                   axis=0).astype(jnp.bfloat16)
    Kh = jnp.stack([K[:, h * d_k:(h + 1) * d_k] for h in range(n_heads)],
                   axis=0).astype(jnp.bfloat16)
    Vh = jnp.stack([V[:, h * d_k:(h + 1) * d_k] for h in range(n_heads)],
                   axis=0).astype(jnp.bfloat16)

    scores = jnp.einsum('hqd,hkd->hqk', Qh, Kh,
                        preferred_element_type=jnp.float32) * scale      # (H, S, S) f32
    m = jnp.max(scores, axis=-1, keepdims=True)
    e = jnp.exp(scores - m)
    attn = e / jnp.sum(e, axis=-1, keepdims=True)                        # exact, f32
    ctx = jnp.einsum('hqk,hkd->hqd', attn.astype(jnp.bfloat16), Vh,
                     preferred_element_type=jnp.float32)                 # (H, S, d_k) f32

    # Scatter head contexts back into contiguous lanes of the VMEM scratch, then do a
    # single full-depth (S,D)x(D,D) output projection (one MXU stream, K=D deep).
    for h in range(n_heads):
        ctx_ref[:, h * d_k:(h + 1) * d_k] = ctx[h]
    out = jax.lax.dot_general(ctx_ref[...].astype(jnp.bfloat16), wo_ref[...], cdims,
                              preferred_element_type=jnp.float32) + bo_ref[...]

    # Residual with the raw f32 query, then LayerNorm over d_model
    # (biased variance, eps=1e-5, matching nn.LayerNorm) — all in f32.
    res = q_res + out
    mean = jnp.mean(res, axis=-1, keepdims=True)
    var = jnp.mean((res - mean) ** 2, axis=-1, keepdims=True)
    normed = (res - mean) * jax.lax.rsqrt(var + LN_EPS)
    out_ref[0] = normed * gamma_ref[...] + beta_ref[...]


def multi_head_attention(query, key, value, params, *, n_heads: int):
    B, S, D = query.shape
    d_k = D // n_heads

    wq, bq, wk, bk, wv, bv, wo, bo, gamma, beta = params

    # MXU operands in bf16: weights cast once here (half the HBM/VMEM footprint);
    # activations are cast inside the kernel right before the matmuls.
    wq_bf, wk_bf, wv_bf, wo_bf = (w.astype(jnp.bfloat16) for w in (wq, wk, wv, wo))
    # Biases / LN params as (1, D) f32 VMEM tiles.
    bq2, bk2, bv2, bo2 = (b.reshape(1, D) for b in (bq, bk, bv, bo))
    gamma2, beta2 = gamma.reshape(1, D), beta.reshape(1, D)

    act_spec = pl.BlockSpec((1, S, D), lambda b: (b, 0, 0))
    w_spec = pl.BlockSpec((D, D), lambda b: (0, 0))
    vec_spec = pl.BlockSpec((1, D), lambda b: (0, 0))

    kernel = functools.partial(mha_kernel, n_heads=n_heads, d_k=d_k)

    flops = B * (8 * S * D * D + 4 * S * S * D)          # 4 projections + QK^T + attn@V
    cost = pl.CostEstimate(
        flops=flops,
        transcendentals=B * n_heads * S * S,              # exp in softmax
        bytes_accessed=4 * 4 * B * S * D + 2 * 4 * D * D + 4 * 6 * D)

    out = pl.pallas_call(
        kernel,
        out_shape=jax.ShapeDtypeStruct((B, S, D), jnp.float32),
        grid=(B,),
        in_specs=[act_spec, act_spec, act_spec,
                  w_spec, vec_spec, w_spec, vec_spec, w_spec, vec_spec,
                  w_spec, vec_spec, vec_spec, vec_spec],
        out_specs=act_spec,
        scratch_shapes=[pltpu.VMEM((S, D), jnp.float32)],  # per-step context buffer
        compiler_params=pltpu.CompilerParams(
            dimension_semantics=("parallel",),             # megacore-shard the batch axis
            vmem_limit_bytes=32 * 1024 * 1024),            # budgeted for v7x (64 MiB phys)
        cost_estimate=cost,
    )(query, key, value,
      wq_bf, bq2, wk_bf, bk2, wv_bf, bv2, wo_bf, bo2, gamma2, beta2)

    return out


def reference(query, key, value, params, *, n_heads: int):
    """Plain-JAX f32 reference mirroring the PyTorch forward (eval mode)."""
    wq, bq, wk, bk, wv, bv, wo, bo, gamma, beta = params
    B, S, D = query.shape
    d_k = D // n_heads
    Q = (query @ wq.T + bq).reshape(B, S, n_heads, d_k).transpose(0, 2, 1, 3)
    K = (key @ wk.T + bk).reshape(B, S, n_heads, d_k).transpose(0, 2, 1, 3)
    V = (value @ wv.T + bv).reshape(B, S, n_heads, d_k).transpose(0, 2, 1, 3)
    scores = Q @ jnp.swapaxes(K, -2, -1) / math.sqrt(d_k)
    attn = jax.nn.softmax(scores, axis=-1)
    ctx = (attn @ V).transpose(0, 2, 1, 3).reshape(B, S, D)
    out = ctx @ wo.T + bo
    res = query + out
    mean = res.mean(-1, keepdims=True)
    var = ((res - mean) ** 2).mean(-1, keepdims=True)
    return (res - mean) / jnp.sqrt(var + LN_EPS) * gamma + beta


if __name__ == "__main__":
    B, S, D, H = 2, 8, 32, 4

    key0 = jax.random.PRNGKey(0)
    keys = jax.random.split(key0, 12)

    def lin_init(kw, kb, fan_in, shape_w):
        bound = 1.0 / math.sqrt(fan_in)
        w = jax.random.uniform(kw, shape_w, jnp.float32, -bound, bound)
        b = jax.random.uniform(kb, (shape_w[0],), jnp.float32, -bound, bound)
        return w, b

    wq, bq = lin_init(keys[0], keys[1], D, (D, D))
    wk, bk = lin_init(keys[2], keys[3], D, (D, D))
    wv, bv = lin_init(keys[4], keys[5], D, (D, D))
    wo, bo = lin_init(keys[6], keys[7], D, (D, D))
    gamma = jnp.ones((D,), jnp.float32)
    beta = jnp.zeros((D,), jnp.float32)
    params = (wq, bq, wk, bk, wv, bv, wo, bo, gamma, beta)

    query = jax.random.normal(keys[8], (B, S, D), jnp.float32)
    key_t = jax.random.normal(keys[9], (B, S, D), jnp.float32)
    value = jax.random.normal(keys[10], (B, S, D), jnp.float32)

    out = multi_head_attention(query, key_t, value, params, n_heads=H)
    out = jax.block_until_ready(out)

    ref = reference(query, key_t, value, params, n_heads=H)
    assert out.shape == (B, S, D)
    # Tolerance accounts for bf16 MXU operands (f32 reference); elementwise math stays f32.
    assert jnp.allclose(out, ref, atol=3e-2, rtol=3e-2), \
        f"max abs err {jnp.max(jnp.abs(out - ref))}"

    print("KERNEL_OK")
</pallas_src>

<mosaic_0001>
module attributes {stable_mosaic.version = 11 : i64} {
  func.func @mha_kernel(%arg0: i32, %arg1: memref<1x8x32xf32, #tpu.memory_space<vmem>>, %arg2: memref<1x8x32xf32, #tpu.memory_space<vmem>>, %arg3: memref<1x8x32xf32, #tpu.memory_space<vmem>>, %arg4: memref<32x32xbf16, #tpu.memory_space<vmem>>, %arg5: memref<1x32xf32, #tpu.memory_space<vmem>>, %arg6: memref<32x32xbf16, #tpu.memory_space<vmem>>, %arg7: memref<1x32xf32, #tpu.memory_space<vmem>>, %arg8: memref<32x32xbf16, #tpu.memory_space<vmem>>, %arg9: memref<1x32xf32, #tpu.memory_space<vmem>>, %arg10: memref<32x32xbf16, #tpu.memory_space<vmem>>, %arg11: memref<1x32xf32, #tpu.memory_space<vmem>>, %arg12: memref<1x32xf32, #tpu.memory_space<vmem>>, %arg13: memref<1x32xf32, #tpu.memory_space<vmem>>, %arg14: memref<1x8x32xf32, #tpu.memory_space<vmem>>, %arg15: memref<8x32xf32, #tpu.memory_space<vmem>>) attributes {dimension_semantics = [#tpu.dimension_semantics<parallel>], iteration_bounds = array<i64: 2>, scalar_prefetch = 0 : i64, scratch_operands = 1 : i64, tpu.core_type = #tpu.core_type<tc>, window_params = [{transform_indices = @transform_0, window_bounds = array<i64: 1, 8, 32>}, {transform_indices = @transform_1, window_bounds = array<i64: 1, 8, 32>}, {transform_indices = @transform_2, window_bounds = array<i64: 1, 8, 32>}, {pipeline_mode = #tpu.pipeline_mode<synchronous>, transform_indices = @transform_3, window_bounds = array<i64: 32, 32>}, {pipeline_mode = #tpu.pipeline_mode<synchronous>, transform_indices = @transform_4, window_bounds = array<i64: 1, 32>}, {pipeline_mode = #tpu.pipeline_mode<synchronous>, transform_indices = @transform_5, window_bounds = array<i64: 32, 32>}, {pipeline_mode = #tpu.pipeline_mode<synchronous>, transform_indices = @transform_6, window_bounds = array<i64: 1, 32>}, {pipeline_mode = #tpu.pipeline_mode<synchronous>, transform_indices = @transform_7, window_bounds = array<i64: 32, 32>}, {pipeline_mode = #tpu.pipeline_mode<synchronous>, transform_indices = @transform_8, window_bounds = array<i64: 1, 32>}, {pipeline_mode = #tpu.pipeline_mode<synchronous>, transform_indices = @transform_9, window_bounds = array<i64: 32, 32>}, {pipeline_mode = #tpu.pipeline_mode<synchronous>, transform_indices = @transform_10, window_bounds = array<i64: 1, 32>}, {pipeline_mode = #tpu.pipeline_mode<synchronous>, transform_indices = @transform_11, window_bounds = array<i64: 1, 32>}, {pipeline_mode = #tpu.pipeline_mode<synchronous>, transform_indices = @transform_12, window_bounds = array<i64: 1, 32>}, {transform_indices = @transform_13, window_bounds = array<i64: 1, 8, 32>}]} {
    %c0 = arith.constant 0 : index
    %c0_0 = arith.constant 0 : index
    %c0_1 = arith.constant 0 : index
    %0 = vector.load %arg1[%c0, %c0_0, %c0_1] : memref<1x8x32xf32, #tpu.memory_space<vmem>>, vector<1x8x32xf32>
    %1 = vector.shape_cast %0 : vector<1x8x32xf32> to vector<8x32xf32>
    %2 = arith.truncf %1 : vector<8x32xf32> to vector<8x32xbf16>
    %c0_2 = arith.constant 0 : index
    %c0_3 = arith.constant 0 : index
    %c0_4 = arith.constant 0 : index
    %3 = vector.load %arg2[%c0_2, %c0_3, %c0_4] : memref<1x8x32xf32, #tpu.memory_space<vmem>>, vector<1x8x32xf32>
    %4 = vector.shape_cast %3 : vector<1x8x32xf32> to vector<8x32xf32>
    %5 = arith.truncf %4 : vector<8x32xf32> to vector<8x32xbf16>
    %c0_5 = arith.constant 0 : index
    %c0_6 = arith.constant 0 : index
    %c0_7 = arith.constant 0 : index
    %6 = vector.load %arg3[%c0_5, %c0_6, %c0_7] : memref<1x8x32xf32, #tpu.memory_space<vmem>>, vector<1x8x32xf32>
    %7 = vector.shape_cast %6 : vector<1x8x32xf32> to vector<8x32xf32>
    %8 = arith.truncf %7 : vector<8x32xf32> to vector<8x32xbf16>
    %c0_8 = arith.constant 0 : index
    %c0_9 = arith.constant 0 : index
    %9 = vector.load %arg4[%c0_8, %c0_9] : memref<32x32xbf16, #tpu.memory_space<vmem>>, vector<32x32xbf16>
    %cst = arith.constant dense<0.000000e+00> : vector<8x32xf32>
    %10 = tpu.matmul %2, %9, %cst {dimension_numbers = #tpu.dot_dimension_numbers<[1], [1], [0], [0], [0, 0, 1, 0], [], []>} : vector<8x32xbf16>, vector<32x32xbf16>, vector<8x32xf32> -> vector<8x32xf32>
    %c0_10 = arith.constant 0 : index
    %c0_11 = arith.constant 0 : index
    %11 = vector.load %arg5[%c0_10, %c0_11] : memref<1x32xf32, #tpu.memory_space<vmem>>, vector<1x32xf32>
    %12 = vector.broadcast %11 : vector<1x32xf32> to vector<8x32xf32>
    %13 = arith.addf %10, %12 : vector<8x32xf32>
    %c0_12 = arith.constant 0 : index
    %c0_13 = arith.constant 0 : index
    %14 = vector.load %arg6[%c0_12, %c0_13] : memref<32x32xbf16, #tpu.memory_space<vmem>>, vector<32x32xbf16>
    %cst_14 = arith.constant dense<0.000000e+00> : vector<8x32xf32>
    %15 = tpu.matmul %5, %14, %cst_14 {dimension_numbers = #tpu.dot_dimension_numbers<[1], [1], [0], [0], [0, 0, 1, 0], [], []>} : vector<8x32xbf16>, vector<32x32xbf16>, vector<8x32xf32> -> vector<8x32xf32>
    %c0_15 = arith.constant 0 : index
    %c0_16 = arith.constant 0 : index
    %16 = vector.load %arg7[%c0_15, %c0_16] : memref<1x32xf32, #tpu.memory_space<vmem>>, vector<1x32xf32>
    %17 = vector.broadcast %16 : vector<1x32xf32> to vector<8x32xf32>
    %18 = arith.addf %15, %17 : vector<8x32xf32>
    %c0_17 = arith.constant 0 : index
    %c0_18 = arith.constant 0 : index
    %19 = vector.load %arg8[%c0_17, %c0_18] : memref<32x32xbf16, #tpu.memory_space<vmem>>, vector<32x32xbf16>
    %cst_19 = arith.constant dense<0.000000e+00> : vector<8x32xf32>
    %20 = tpu.matmul %8, %19, %cst_19 {dimension_numbers = #tpu.dot_dimension_numbers<[1], [1], [0], [0], [0, 0, 1, 0], [], []>} : vector<8x32xbf16>, vector<32x32xbf16>, vector<8x32xf32> -> vector<8x32xf32>
    %c0_20 = arith.constant 0 : index
    %c0_21 = arith.constant 0 : index
    %21 = vector.load %arg9[%c0_20, %c0_21] : memref<1x32xf32, #tpu.memory_space<vmem>>, vector<1x32xf32>
    %22 = vector.broadcast %21 : vector<1x32xf32> to vector<8x32xf32>
    %23 = arith.addf %20, %22 : vector<8x32xf32>
    %24 = vector.extract_strided_slice %13 {offsets = [0, 0], sizes = [8, 8], strides = [1, 1]} : vector<8x32xf32> to vector<8x8xf32>
    %25 = vector.extract_strided_slice %13 {offsets = [0, 8], sizes = [8, 8], strides = [1, 1]} : vector<8x32xf32> to vector<8x8xf32>
    %26 = vector.extract_strided_slice %13 {offsets = [0, 16], sizes = [8, 8], strides = [1, 1]} : vector<8x32xf32> to vector<8x8xf32>
    %27 = vector.extract_strided_slice %13 {offsets = [0, 24], sizes = [8, 8], strides = [1, 1]} : vector<8x32xf32> to vector<8x8xf32>
    %28 = vector.shape_cast %24 : vector<8x8xf32> to vector<1x8x8xf32>
    %29 = vector.shape_cast %25 : vector<8x8xf32> to vector<1x8x8xf32>
    %30 = vector.shape_cast %26 : vector<8x8xf32> to vector<1x8x8xf32>
    %31 = vector.shape_cast %27 : vector<8x8xf32> to vector<1x8x8xf32>
    %32 = tpu.concatenate %28, %29, %30, %31 in 0 : vector<1x8x8xf32>, vector<1x8x8xf32>, vector<1x8x8xf32>, vector<1x8x8xf32> -> vector<4x8x8xf32>
    %33 = arith.truncf %32 : vector<4x8x8xf32> to vector<4x8x8xbf16>
    %34 = vector.extract_strided_slice %18 {offsets = [0, 0], sizes = [8, 8], strides = [1, 1]} : vector<8x32xf32> to vector<8x8xf32>
    %35 = vector.extract_strided_slice %18 {offsets = [0, 8], sizes = [8, 8], strides = [1, 1]} : vector<8x32xf32> to vector<8x8xf32>
    %36 = vector.extract_strided_slice %18 {offsets = [0, 16], sizes = [8, 8], strides = [1, 1]} : vector<8x32xf32> to vector<8x8xf32>
    %37 = vector.extract_strided_slice %18 {offsets = [0, 24], sizes = [8, 8], strides = [1, 1]} : vector<8x32xf32> to vector<8x8xf32>
    %38 = vector.shape_cast %34 : vector<8x8xf32> to vector<1x8x8xf32>
    %39 = vector.shape_cast %35 : vector<8x8xf32> to vector<1x8x8xf32>
    %40 = vector.shape_cast %36 : vector<8x8xf32> to vector<1x8x8xf32>
    %41 = vector.shape_cast %37 : vector<8x8xf32> to vector<1x8x8xf32>
    %42 = tpu.concatenate %38, %39, %40, %41 in 0 : vector<1x8x8xf32>, vector<1x8x8xf32>, vector<1x8x8xf32>, vector<1x8x8xf32> -> vector<4x8x8xf32>
    %43 = arith.truncf %42 : vector<4x8x8xf32> to vector<4x8x8xbf16>
    %44 = vector.extract_strided_slice %23 {offsets = [0, 0], sizes = [8, 8], strides = [1, 1]} : vector<8x32xf32> to vector<8x8xf32>
    %45 = vector.extract_strided_slice %23 {offsets = [0, 8], sizes = [8, 8], strides = [1, 1]} : vector<8x32xf32> to vector<8x8xf32>
    %46 = vector.extract_strided_slice %23 {offsets = [0, 16], sizes = [8, 8], strides = [1, 1]} : vector<8x32xf32> to vector<8x8xf32>
    %47 = vector.extract_strided_slice %23 {offsets = [0, 24], sizes = [8, 8], strides = [1, 1]} : vector<8x32xf32> to vector<8x8xf32>
    %48 = vector.shape_cast %44 : vector<8x8xf32> to vector<1x8x8xf32>
    %49 = vector.shape_cast %45 : vector<8x8xf32> to vector<1x8x8xf32>
    %50 = vector.shape_cast %46 : vector<8x8xf32> to vector<1x8x8xf32>
    %51 = vector.shape_cast %47 : vector<8x8xf32> to vector<1x8x8xf32>
    %52 = tpu.concatenate %48, %49, %50, %51 in 0 : vector<1x8x8xf32>, vector<1x8x8xf32>, vector<1x8x8xf32>, vector<1x8x8xf32> -> vector<4x8x8xf32>
    %53 = arith.truncf %52 : vector<4x8x8xf32> to vector<4x8x8xbf16>
    "tpu.trace_start"() <{level = 10 : i32, message = "hqd,hkd->hqk"}> : () -> ()
    %cst_22 = arith.constant dense<0.000000e+00> : vector<4x8x8xf32>
    %54 = tpu.matmul %33, %43, %cst_22 {dimension_numbers = #tpu.dot_dimension_numbers<[2], [2], [1], [1], [0, 0, 0, 1, 1, 1], [0], [0]>} : vector<4x8x8xbf16>, vector<4x8x8xbf16>, vector<4x8x8xf32> -> vector<4x8x8xf32>
    "tpu.trace_stop"() : () -> ()
    %cst_23 = arith.constant 0.353553385 : f32
    %55 = vector.broadcast %cst_23 : f32 to vector<4x8x8xf32>
    %56 = arith.mulf %54, %55 : vector<4x8x8xf32>
    %cst_24 = arith.constant dense<0xFF800000> : vector<4x8xf32>
    %57 = vector.multi_reduction <maximumf>, %56, %cst_24 [2] : vector<4x8x8xf32> to vector<4x8xf32>
    %58 = vector.shape_cast %57 : vector<4x8xf32> to vector<4x8x1xf32>
    %59 = vector.broadcast %58 : vector<4x8x1xf32> to vector<4x8x8xf32>
    %60 = arith.subf %56, %59 : vector<4x8x8xf32>
    %61 = math.exp %60 : vector<4x8x8xf32>
    %cst_25 = arith.constant dense<0.000000e+00> : vector<4x8xf32>
    %62 = vector.multi_reduction <add>, %61, %cst_25 [2] : vector<4x8x8xf32> to vector<4x8xf32>
    %63 = vector.shape_cast %62 : vector<4x8xf32> to vector<4x8x1xf32>
    %64 = vector.broadcast %63 : vector<4x8x1xf32> to vector<4x8x8xf32>
    %65 = arith.divf %61, %64 : vector<4x8x8xf32>
    %66 = arith.truncf %65 : vector<4x8x8xf32> to vector<4x8x8xbf16>
    "tpu.trace_start"() <{level = 10 : i32, message = "hqk,hkd->hqd"}> : () -> ()
    %cst_26 = arith.constant dense<0.000000e+00> : vector<4x8x8xf32>
    %67 = tpu.matmul %66, %53, %cst_26 {dimension_numbers = #tpu.dot_dimension_numbers<[2], [1], [1], [2], [0, 0, 0, 1, 1, 2], [0], [0]>} : vector<4x8x8xbf16>, vector<4x8x8xbf16>, vector<4x8x8xf32> -> vector<4x8x8xf32>
    "tpu.trace_stop"() : () -> ()
    %68 = vector.extract_strided_slice %67 {offsets = [0, 0, 0], sizes = [1, 8, 8], strides = [1, 1, 1]} : vector<4x8x8xf32> to vector<1x8x8xf32>
    %69 = vector.shape_cast %68 : vector<1x8x8xf32> to vector<8x8xf32>
    %c0_27 = arith.constant 0 : index
    %c0_28 = arith.constant 0 : index
    %70 = vector.load %arg15[%c0_27, %c0_28] : memref<8x32xf32, #tpu.memory_space<vmem>>, vector<8x8xf32>
    tpu.vector_store %arg15[%c0_27, %c0_28], %69 {strides = array<i32>} : memref<8x32xf32, #tpu.memory_space<vmem>>, vector<8x8xf32>,
    %71 = vector.extract_strided_slice %67 {offsets = [1, 0, 0], sizes = [1, 8, 8], strides = [1, 1, 1]} : vector<4x8x8xf32> to vector<1x8x8xf32>
    %72 = vector.shape_cast %71 : vector<1x8x8xf32> to vector<8x8xf32>
    %c0_29 = arith.constant 0 : index
    %c8 = arith.constant 8 : index
    %73 = vector.load %arg15[%c0_29, %c8] : memref<8x32xf32, #tpu.memory_space<vmem>>, vector<8x8xf32>
    tpu.vector_store %arg15[%c0_29, %c8], %72 {strides = array<i32>} : memref<8x32xf32, #tpu.memory_space<vmem>>, vector<8x8xf32>,
    %74 = vector.extract_strided_slice %67 {offsets = [2, 0, 0], sizes = [1, 8, 8], strides = [1, 1, 1]} : vector<4x8x8xf32> to vector<1x8x8xf32>
    %75 = vector.shape_cast %74 : vector<1x8x8xf32> to vector<8x8xf32>
    %c0_30 = arith.constant 0 : index
    %c16 = arith.constant 16 : index
    %76 = vector.load %arg15[%c0_30, %c16] : memref<8x32xf32, #tpu.memory_space<vmem>>, vector<8x8xf32>
    tpu.vector_store %arg15[%c0_30, %c16], %75 {strides = array<i32>} : memref<8x32xf32, #tpu.memory_space<vmem>>, vector<8x8xf32>,
    %77 = vector.extract_strided_slice %67 {offsets = [3, 0, 0], sizes = [1, 8, 8], strides = [1, 1, 1]} : vector<4x8x8xf32> to vector<1x8x8xf32>
    %78 = vector.shape_cast %77 : vector<1x8x8xf32> to vector<8x8xf32>
    %c0_31 = arith.constant 0 : index
    %c24 = arith.constant 24 : index
    %79 = vector.load %arg15[%c0_31, %c24] : memref<8x32xf32, #tpu.memory_space<vmem>>, vector<8x8xf32>
    tpu.vector_store %arg15[%c0_31, %c24], %78 {strides = array<i32>} : memref<8x32xf32, #tpu.memory_space<vmem>>, vector<8x8xf32>,
    %c0_32 = arith.constant 0 : index
    %c0_33 = arith.constant 0 : index
    %80 = vector.load %arg15[%c0_32, %c0_33] : memref<8x32xf32, #tpu.memory_space<vmem>>, vector<8x32xf32>
    %81 = arith.truncf %80 : vector<8x32xf32> to vector<8x32xbf16>
    %c0_34 = arith.constant 0 : index
    %c0_35 = arith.constant 0 : index
    %82 = vector.load %arg10[%c0_34, %c0_35] : memref<32x32xbf16, #tpu.memory_space<vmem>>, vector<32x32xbf16>
    %cst_36 = arith.constant dense<0.000000e+00> : vector<8x32xf32>
    %83 = tpu.matmul %81, %82, %cst_36 {dimension_numbers = #tpu.dot_dimension_numbers<[1], [1], [0], [0], [0, 0, 1, 0], [], []>} : vector<8x32xbf16>, vector<32x32xbf16>, vector<8x32xf32> -> vector<8x32xf32>
    %c0_37 = arith.constant 0 : index
    %c0_38 = arith.constant 0 : index
    %84 = vector.load %arg11[%c0_37, %c0_38] : memref<1x32xf32, #tpu.memory_space<vmem>>, vector<1x32xf32>
    %85 = vector.broadcast %84 : vector<1x32xf32> to vector<8x32xf32>
    %86 = arith.addf %83, %85 : vector<8x32xf32>
    %87 = arith.addf %1, %86 : vector<8x32xf32>
    %cst_39 = arith.constant dense<0.000000e+00> : vector<8xf32>
    %88 = vector.multi_reduction <add>, %87, %cst_39 [1] : vector<8x32xf32> to vector<8xf32>
    %89 = vector.shape_cast %88 : vector<8xf32> to vector<8x1xf32>
    %cst_40 = arith.constant 3.200000e+01 : f32
    %90 = vector.broadcast %cst_40 : f32 to vector<8x1xf32>
    %91 = arith.divf %89, %90 : vector<8x1xf32>
    %92 = vector.broadcast %91 : vector<8x1xf32> to vector<8x32xf32>
    %93 = arith.subf %87, %92 : vector<8x32xf32>
    %94 = arith.mulf %93, %93 : vector<8x32xf32>
    %cst_41 = arith.constant dense<0.000000e+00> : vector<8xf32>
    %95 = vector.multi_reduction <add>, %94, %cst_41 [1] : vector<8x32xf32> to vector<8xf32>
    %96 = vector.shape_cast %95 : vector<8xf32> to vector<8x1xf32>
    %cst_42 = arith.constant 3.200000e+01 : f32
    %97 = vector.broadcast %cst_42 : f32 to vector<8x1xf32>
    %98 = arith.divf %96, %97 : vector<8x1xf32>
    %99 = vector.broadcast %91 : vector<8x1xf32> to vector<8x32xf32>
    %100 = arith.subf %87, %99 : vector<8x32xf32>
    %cst_43 = arith.constant 9.99999974E-6 : f32
    %101 = vector.broadcast %cst_43 : f32 to vector<8x1xf32>
    %102 = arith.addf %98, %101 : vector<8x1xf32>
    %103 = math.rsqrt %102 : vector<8x1xf32>
    %104 = vector.broadcast %103 : vector<8x1xf32> to vector<8x32xf32>
    %105 = arith.mulf %100, %104 : vector<8x32xf32>
    %c0_44 = arith.constant 0 : index
    %c0_45 = arith.constant 0 : index
    %106 = vector.load %arg12[%c0_44, %c0_45] : memref<1x32xf32, #tpu.memory_space<vmem>>, vector<1x32xf32>
    %107 = vector.broadcast %106 : vector<1x32xf32> to vector<8x32xf32>
    %108 = arith.mulf %105, %107 : vector<8x32xf32>
    %c0_46 = arith.constant 0 : index
    %c0_47 = arith.constant 0 : index
    %109 = vector.load %arg13[%c0_46, %c0_47] : memref<1x32xf32, #tpu.memory_space<vmem>>, vector<1x32xf32>
    %110 = vector.broadcast %109 : vector<1x32xf32> to vector<8x32xf32>
    %111 = arith.addf %108, %110 : vector<8x32xf32>
    %c0_48 = arith.constant 0 : index
    %c0_49 = arith.constant 0 : index
    %c0_50 = arith.constant 0 : index
    %112 = vector.load %arg14[%c0_48, %c0_49, %c0_50] : memref<1x8x32xf32, #tpu.memory_space<vmem>>, vector<1x8x32xf32>
    %113 = vector.shape_cast %112 : vector<1x8x32xf32> to vector<8x32xf32>
    %114 = vector.shape_cast %111 : vector<8x32xf32> to vector<1x8x32xf32>
    tpu.vector_store %arg14[%c0_48, %c0_49, %c0_50], %114 {strides = array<i32>} : memref<1x8x32xf32, #tpu.memory_space<vmem>>, vector<1x8x32xf32>,
    return
  }
  func.func @transform_0(%arg0: i32) -> (i32, i32, i32) {
    %c0_i32 = arith.constant 0 : i32
    %c0_i32_0 = arith.constant 0 : i32
    %c0_i32_1 = arith.constant 0 : i32
    return %arg0, %c0_i32, %c0_i32_0 : i32, i32, i32
  }
  func.func @transform_1(%arg0: i32) -> (i32, i32, i32) {
    %c0_i32 = arith.constant 0 : i32
    %c0_i32_0 = arith.constant 0 : i32
    %c0_i32_1 = arith.constant 0 : i32
    return %arg0, %c0_i32, %c0_i32_0 : i32, i32, i32
  }
  func.func @transform_2(%arg0: i32) -> (i32, i32, i32) {
    %c0_i32 = arith.constant 0 : i32
    %c0_i32_0 = arith.constant 0 : i32
    %c0_i32_1 = arith.constant 0 : i32
    return %arg0, %c0_i32, %c0_i32_0 : i32, i32, i32
  }
  func.func @transform_3(%arg0: i32) -> (i32, i32) {
    %c0_i32 = arith.constant 0 : i32
    %c0_i32_0 = arith.constant 0 : i32
    %c0_i32_1 = arith.constant 0 : i32
    return %c0_i32, %c0_i32_0 : i32, i32
  }
  func.func @transform_4(%arg0: i32) -> (i32, i32) {
    %c0_i32 = arith.constant 0 : i32
    %c0_i32_0 = arith.constant 0 : i32
    %c0_i32_1 = arith.constant 0 : i32
    return %c0_i32, %c0_i32_0 : i32, i32
  }
  func.func @transform_5(%arg0: i32) -> (i32, i32) {
    %c0_i32 = arith.constant 0 : i32
    %c0_i32_0 = arith.constant 0 : i32
    %c0_i32_1 = arith.constant 0 : i32
    return %c0_i32, %c0_i32_0 : i32, i32
  }
  func.func @transform_6(%arg0: i32) -> (i32, i32) {
    %c0_i32 = arith.constant 0 : i32
    %c0_i32_0 = arith.constant 0 : i32
    %c0_i32_1 = arith.constant 0 : i32
    return %c0_i32, %c0_i32_0 : i32, i32
  }
  func.func @transform_7(%arg0: i32) -> (i32, i32) {
    %c0_i32 = arith.constant 0 : i32
    %c0_i32_0 = arith.constant 0 : i32
    %c0_i32_1 = arith.constant 0 : i32
    return %c0_i32, %c0_i32_0 : i32, i32
  }
  func.func @transform_8(%arg0: i32) -> (i32, i32) {
    %c0_i32 = arith.constant 0 : i32
    %c0_i32_0 = arith.constant 0 : i32
    %c0_i32_1 = arith.constant 0 : i32
    return %c0_i32, %c0_i32_0 : i32, i32
  }
  func.func @transform_9(%arg0: i32) -> (i32, i32) {
    %c0_i32 = arith.constant 0 : i32
    %c0_i32_0 = arith.constant 0 : i32
    %c0_i32_1 = arith.constant 0 : i32
    return %c0_i32, %c0_i32_0 : i32, i32
  }
  func.func @transform_10(%arg0: i32) -> (i32, i32) {
    %c0_i32 = arith.constant 0 : i32
    %c0_i32_0 = arith.constant 0 : i32
    %c0_i32_1 = arith.constant 0 : i32
    return %c0_i32, %c0_i32_0 : i32, i32
  }
  func.func @transform_11(%arg0: i32) -> (i32, i32) {
    %c0_i32 = arith.constant 0 : i32
    %c0_i32_0 = arith.constant 0 : i32
    %c0_i32_1 = arith.constant 0 : i32
    return %c0_i32, %c0_i32_0 : i32, i32
  }
  func.func @transform_12(%arg0: i32) -> (i32, i32) {
    %c0_i32 = arith.constant 0 : i32
    %c0_i32_0 = arith.constant 0 : i32
    %c0_i32_1 = arith.constant 0 : i32
    return %c0_i32, %c0_i32_0 : i32, i32
  }
  func.func @transform_13(%arg0: i32) -> (i32, i32, i32) {
    %c0_i32 = arith.constant 0 : i32
    %c0_i32_0 = arith.constant 0 : i32
    %c0_i32_1 = arith.constant 0 : i32
    return %arg0, %c0_i32, %c0_i32_0 : i32, i32, i32
  }
}

</mosaic_0001>

<llo_original>
// kernel: tpu_custom_call.1
$region0: #{tpu_custom_call.1}
  #allocation0 [shape = 'u32[]', space=smem, size = 0x4, offset = 0x4, fixed_abs, tag = 'smem constant byte address 0x4 - core index']
  #allocation1 [shape = 'u32[144,128]{1,0:T(1,128)}', space=vmem, size = 0x12000, scoped, tag = 'internal scratch']
  #allocation2 [shape = 'f32[8,32]{1,0:T(8,128)}', space=vmem, size = 0x1000, scoped, tag = 'scratch operand']
  %s0 = inlined_call_operand.hbm [shape: f32[2,8,32], index: 0, kind: input, shape index: {}]
  %s1 = inlined_call_operand.hbm [shape: f32[2,8,32], index: 1, kind: input, shape index: {}]
  %s2 = inlined_call_operand.hbm [shape: f32[2,8,32], index: 2, kind: input, shape index: {}]
  %s3 = inlined_call_operand.hbm [shape: bf16[32,32], index: 3, kind: input, shape index: {}]
  %s4 = inlined_call_operand.vmem [shape: f32[1,32], index: 4, kind: input, shape index: {}]
  %s5 = inlined_call_operand.vmem [shape: bf16[32,32], index: 5, kind: input, shape index: {}]
  %s6 = inlined_call_operand.vmem [shape: f32[1,32], index: 6, kind: input, shape index: {}]
  %s7 = inlined_call_operand.hbm [shape: bf16[32,32], index: 7, kind: input, shape index: {}]
  %s8 = inlined_call_operand.hbm [shape: f32[1,32], index: 8, kind: input, shape index: {}]
  %s9 = inlined_call_operand.vmem [shape: bf16[32,32], index: 9, kind: input, shape index: {}]
  %s10 = inlined_call_operand.vmem [shape: f32[1,32], index: 10, kind: input, shape index: {}]
  %s11 = inlined_call_operand.vmem [shape: f32[1,32], index: 11, kind: input, shape index: {}]
  %s12 = inlined_call_operand.vmem [shape: f32[1,32], index: 12, kind: input, shape index: {}]
  %s13 = inlined_call_operand.hbm [shape: f32[2,8,32], index: 13, kind: output, shape index: {}]
  %s14 = sld [smem:[#allocation0]]
  $region109: #{tpu_custom_call.1} parent=0
    _
  %s16 = ssub.s32 1, %s14
  %s17 = scalar_select 0, %s16, %s14
  $region1: #{tpu_custom_call.1} parent=0
    #allocation3 [shape = 'u8[8192]{0}', space=vmem, size = 0x2000, scoped, tag = 'input window, operand 0']
    #allocation4 [shape = 's32[2]{0}', space=sflag, size = 0x8, scoped, tag = 'scoped memory for tpu_custom_call.1']
    #allocation5 [shape = 's32[2]{0}', space=sflag, size = 0x8, scoped, tag = 'scoped memory for tpu_custom_call.1']
    #allocation6 [shape = 'u8[8192]{0}', space=vmem, size = 0x2000, scoped, tag = 'input window, operand 1']
    #allocation7 [shape = 's32[2]{0}', space=sflag, size = 0x8, scoped, tag = 'scoped memory for tpu_custom_call.1']
    #allocation8 [shape = 'u8[8192]{0}', space=vmem, size = 0x2000, scoped, tag = 'input window, operand 2']
    #allocation9 [shape = 'u8[8192]{0}', space=vmem, size = 0x2000, scoped, tag = 'input window, operand 3, single buffered']
    #allocation10 [shape = 's32[1]{0}', space=sflag, size = 0x4, scoped, tag = 'scoped memory for tpu_custom_call.1']
    #allocation11 [shape = 'u8[8192]{0}', space=vmem, size = 0x2000, scoped, tag = 'input window, operand 7, single buffered']
    #allocation12 [shape = 'u8[512]{0}', space=vmem, size = 0x400, scoped, tag = 'input window, operand 8, single buffered']
    #allocation13 [shape = 's32[1]{0}', space=sflag, size = 0x4, scoped, tag = 'scoped memory for tpu_custom_call.1']
    #allocation14 [shape = 'u8[8192]{0}', space=vmem, size = 0x2000, scoped, tag = 'output window, operand 0']
    %18 = vsyncpa [#allocation4], 0
    %s19 = scalar_lea.sflag [#allocation4], 1
    %20 = vsyncpa %s19, 0
    %21 = vsyncpa [#allocation7], 0
    %s22 = scalar_lea.sflag [#allocation7], 1
    %23 = vsyncpa %s22, 0
    %24 = vsyncpa [#allocation10], 0
    %25 = vsyncpa [#allocation13], 0
    %26 = vsyncpa [#allocation5], 0
    %s27 = scalar_lea.sflag [#allocation5], 1
    %28 = vsyncpa %s27, 0
    loop: start=0, step=1, limit=4
    $region2: #{tpu_custom_call.1} parent=1 // loop_pre_header
      _
    $region3: #{tpu_custom_call.1} parent=1 // loop_header
      %s30 = sphi 0, %s34
      %p31 = scmp.ge.s32.totalorder %s30, 4
      %s40 = sphi 0, %s42
      %s43 = sphi 0, %s40
      %s44 = sphi 0, %s43
      %s60 = sphi 0, %s44
      %s66 = sphi 0, %s68
      %s69 = sphi 0, %s66
      %s70 = sphi 0, %s69
      %s86 = sphi 0, %s70
      %s92 = sphi 0, %s94
      %s95 = sphi 0, %s92
      %s96 = sphi 0, %s95
      %s112 = sphi 0, %s96
      %s116 = sphi 0, %s116
      %s118 = sphi 0, %s116
      %s119 = sphi 0, %s118
      %s133 = sphi 0, %s119
      %s137 = sphi 0, %s137
      %s139 = sphi 0, %s137
      %s140 = sphi 0, %s139
      %s154 = sphi 0, %s140
      %s158 = sphi 0, %s158
      %s160 = sphi 0, %s158
      %s161 = sphi 0, %s160
      %s175 = sphi 0, %s161
      %s179 = sphi 0, %s179
      %s181 = sphi 0, %s179
      %s182 = sphi 0, %s181
      %s196 = sphi 0, %s182
      %s200 = sphi 0, %s200
      %s202 = sphi 0, %s200
      %s203 = sphi 0, %s202
      %s217 = sphi 0, %s203
      %s221 = sphi 0, %s221
      %s223 = sphi 0, %s221
      %s224 = sphi 0, %s223
      %s238 = sphi 0, %s224
      %s242 = sphi 0, %s242
      %s244 = sphi 0, %s242
      %s245 = sphi 0, %s244
      %s259 = sphi 0, %s245
      %s263 = sphi 0, %s263
      %s265 = sphi 0, %s263
      %s266 = sphi 0, %s265
      %s280 = sphi 0, %s266
      %s284 = sphi 0, %s284
      %s286 = sphi 0, %s284
      %s287 = sphi 0, %s286
      %s301 = sphi 0, %s287
      %s305 = sphi 0, %s305
      %s307 = sphi 0, %s305
      %s308 = sphi 0, %s307
      %s322 = sphi 0, %s308
      %s328 = sphi 0, %s330
      %s331 = sphi 0, %s328
      %s332 = sphi 0, %s331
      %s348 = sphi 0, %s332
    $region4: #{tpu_custom_call.1} parent=1 // loop_header_branch
      %33 = sbr.rel (%p31) target = $region8
    $region5: #{tpu_custom_call.1} parent=1 // loop_body
      %s35 = ssub.s32 %s30, 1
      %s36 = ssub.s32 %s30, 2
      %s37 = sadd.s32 %s30, 1
      %s38 = ssub.s32 %s30, %s37
      %p39 = scmp.eq.s32.totalorder %s38, 0
      %s41 = sadd.s32 %s40, 1
      %s42 = scalar_select %p39, %s40, %s41
      %p45 = pneg %p39
      %p46 = scmp.eq.s32.totalorder %s30, 1
      %p47 = por %p45, %p46
      %p48 = scmp.ne.s32.totalorder %s40, %s43
      %p49 = scmp.eq.s32.totalorder %s30, 0
      %p50 = por %p48, %p49
      %p51 = scmp.ne.s32.totalorder %s40, %s43
      %p52 = scmp.eq.s32.totalorder %s35, 1
      %p53 = por %p51, %p52
      %p54 = scmp.ne.s32.totalorder %s43, %s44
      %p55 = scmp.eq.s32.totalorder %s35, 0
      %p56 = por %p54, %p55
      %p57 = scmp.ne.s32.totalorder %s43, %s44
      %p58 = scmp.eq.s32.totalorder %s36, 1
      %p59 = por %p57, %p58
      %p61 = scmp.ne.s32.totalorder %s44, %s60
      %p62 = scmp.eq.s32.totalorder %s36, 0
      %p63 = por %p61, %p62
      %s64 = ssub.s32 %s30, %s37
      %p65 = scmp.eq.s32.totalorder %s64, 0
      %s67 = sadd.s32 %s66, 1
      %s68 = scalar_select %p65, %s66, %s67
      %p71 = pneg %p65
      %p72 = scmp.eq.s32.totalorder %s30, 1
      %p73 = por %p71, %p72
      %p74 = scmp.ne.s32.totalorder %s66, %s69
      %p75 = scmp.eq.s32.totalorder %s30, 0
      %p76 = por %p74, %p75
      %p77 = scmp.ne.s32.totalorder %s66, %s69
      %p78 = scmp.eq.s32.totalorder %s35, 1
      %p79 = por %p77, %p78
      %p80 = scmp.ne.s32.totalorder %s69, %s70
      %p81 = scmp.eq.s32.totalorder %s35, 0
      %p82 = por %p80, %p81
      %p83 = scmp.ne.s32.totalorder %s69, %s70
      %p84 = scmp.eq.s32.totalorder %s36, 1
      %p85 = por %p83, %p84
      %p87 = scmp.ne.s32.totalorder %s70, %s86
      %p88 = scmp.eq.s32.totalorder %s36, 0
      %p89 = por %p87, %p88
      %s90 = ssub.s32 %s30, %s37
      %p91 = scmp.eq.s32.totalorder %s90, 0
      %s93 = sadd.s32 %s92, 1
      %s94 = scalar_select %p91, %s92, %s93
      %p97 = pneg %p91
      %p98 = scmp.eq.s32.totalorder %s30, 1
      %p99 = por %p97, %p98
      %p100 = scmp.ne.s32.totalorder %s92, %s95
      %p101 = scmp.eq.s32.totalorder %s30, 0
      %p102 = por %p100, %p101
      %p103 = scmp.ne.s32.totalorder %s92, %s95
      %p104 = scmp.eq.s32.totalorder %s35, 1
      %p105 = por %p103, %p104
      %p106 = scmp.ne.s32.totalorder %s95, %s96
      %p107 = scmp.eq.s32.totalorder %s35, 0
      %p108 = por %p106, %p107
      %p109 = scmp.ne.s32.totalorder %s95, %s96
      %p110 = scmp.eq.s32.totalorder %s36, 1
      %p111 = por %p109, %p110
      %p113 = scmp.ne.s32.totalorder %s96, %s112
      %p114 = scmp.eq.s32.totalorder %s36, 0
      %p115 = por %p113, %p114
      %s117 = sadd.s32 %s116, 1
      %p120 = scmp.eq.s32.totalorder %s30, 1
      %p121 = scmp.ne.s32.totalorder %s116, %s118
      %p122 = scmp.eq.s32.totalorder %s30, 0
      %p123 = por %p121, %p122
      %p124 = scmp.ne.s32.totalorder %s116, %s118
      %p125 = scmp.eq.s32.totalorder %s35, 1
      %p126 = por %p124, %p125
      %p127 = scmp.ne.s32.totalorder %s118, %s119
      %p128 = scmp.eq.s32.totalorder %s35, 0
      %p129 = por %p127, %p128
      %p130 = scmp.ne.s32.totalorder %s118, %s119
      %p131 = scmp.eq.s32.totalorder %s36, 1
      %p132 = por %p130, %p131
      %p134 = scmp.ne.s32.totalorder %s119, %s133
      %p135 = scmp.eq.s32.totalorder %s36, 0
      %p136 = por %p134, %p135
      %s138 = sadd.s32 %s137, 1
      %p141 = scmp.eq.s32.totalorder %s30, 1
      %p142 = scmp.ne.s32.totalorder %s137, %s139
      %p143 = scmp.eq.s32.totalorder %s30, 0
      %p144 = por %p142, %p143
      %p145 = scmp.ne.s32.totalorder %s137, %s139
      %p146 = scmp.eq.s32.totalorder %s35, 1
      %p147 = por %p145, %p146
      %p148 = scmp.ne.s32.totalorder %s139, %s140
      %p149 = scmp.eq.s32.totalorder %s35, 0
      %p150 = por %p148, %p149
      %p151 = scmp.ne.s32.totalorder %s139, %s140
      %p152 = scmp.eq.s32.totalorder %s36, 1
      %p153 = por %p151, %p152
      %p155 = scmp.ne.s32.totalorder %s140, %s154
      %p156 = scmp.eq.s32.totalorder %s36, 0
      %p157 = por %p155, %p156
      %s159 = sadd.s32 %s158, 1
      %p162 = scmp.eq.s32.totalorder %s30, 1
      %p163 = scmp.ne.s32.totalorder %s158, %s160
      %p164 = scmp.eq.s32.totalorder %s30, 0
      %p165 = por %p163, %p164
      %p166 = scmp.ne.s32.totalorder %s158, %s160
      %p167 = scmp.eq.s32.totalorder %s35, 1
      %p168 = por %p166, %p167
      %p169 = scmp.ne.s32.totalorder %s160, %s161
      %p170 = scmp.eq.s32.totalorder %s35, 0
      %p171 = por %p169, %p170
      %p172 = scmp.ne.s32.totalorder %s160, %s161
      %p173 = scmp.eq.s32.totalorder %s36, 1
      %p174 = por %p172, %p173
      %p176 = scmp.ne.s32.totalorder %s161, %s175
      %p177 = scmp.eq.s32.totalorder %s36, 0
      %p178 = por %p176, %p177
      %s180 = sadd.s32 %s179, 1
      %p183 = scmp.eq.s32.totalorder %s30, 1
      %p184 = scmp.ne.s32.totalorder %s179, %s181
      %p185 = scmp.eq.s32.totalorder %s30, 0
      %p186 = por %p184, %p185
      %p187 = scmp.ne.s32.totalorder %s179, %s181
      %p188 = scmp.eq.s32.totalorder %s35, 1
      %p189 = por %p187, %p188
      %p190 = scmp.ne.s32.totalorder %s181, %s182
      %p191 = scmp.eq.s32.totalorder %s35, 0
      %p192 = por %p190, %p191
      %p193 = scmp.ne.s32.totalorder %s181, %s182
      %p194 = scmp.eq.s32.totalorder %s36, 1
      %p195 = por %p193, %p194
      %p197 = scmp.ne.s32.totalorder %s182, %s196
      %p198 = scmp.eq.s32.totalorder %s36, 0
      %p199 = por %p197, %p198
      %s201 = sadd.s32 %s200, 1
      %p204 = scmp.eq.s32.totalorder %s30, 1
      %p205 = scmp.ne.s32.totalorder %s200, %s202
      %p206 = scmp.eq.s32.totalorder %s30, 0
      %p207 = por %p205, %p206
      %p208 = scmp.ne.s32.totalorder %s200, %s202
      %p209 = scmp.eq.s32.totalorder %s35, 1
      %p210 = por %p208, %p209
      %p211 = scmp.ne.s32.totalorder %s202, %s203
      %p212 = scmp.eq.s32.totalorder %s35, 0
      %p213 = por %p211, %p212
      %p214 = scmp.ne.s32.totalorder %s202, %s203
      %p215 = scmp.eq.s32.totalorder %s36, 1
      %p216 = por %p214, %p215
      %p218 = scmp.ne.s32.totalorder %s203, %s217
      %p219 = scmp.eq.s32.totalorder %s36, 0
      %p220 = por %p218, %p219
      %s222 = sadd.s32 %s221, 1
      %p225 = scmp.eq.s32.totalorder %s30, 1
      %p226 = scmp.ne.s32.totalorder %s221, %s223
      %p227 = scmp.eq.s32.totalorder %s30, 0
      %p228 = por %p226, %p227
      %p229 = scmp.ne.s32.totalorder %s221, %s223
      %p230 = scmp.eq.s32.totalorder %s35, 1
      %p231 = por %p229, %p230
      %p232 = scmp.ne.s32.totalorder %s223, %s224
      %p233 = scmp.eq.s32.totalorder %s35, 0
      %p234 = por %p232, %p233
      %p235 = scmp.ne.s32.totalorder %s223, %s224
      %p236 = scmp.eq.s32.totalorder %s36, 1
      %p237 = por %p235, %p236
      %p239 = scmp.ne.s32.totalorder %s224, %s238
      %p240 = scmp.eq.s32.totalorder %s36, 0
      %p241 = por %p239, %p240
      %s243 = sadd.s32 %s242, 1
      %p246 = scmp.eq.s32.totalorder %s30, 1
      %p247 = scmp.ne.s32.totalorder %s242, %s244
      %p248 = scmp.eq.s32.totalorder %s30, 0
      %p249 = por %p247, %p248
      %p250 = scmp.ne.s32.totalorder %s242, %s244
      %p251 = scmp.eq.s32.totalorder %s35, 1
      %p252 = por %p250, %p251
      %p253 = scmp.ne.s32.totalorder %s244, %s245
      %p254 = scmp.eq.s32.totalorder %s35, 0
      %p255 = por %p253, %p254
      %p256 = scmp.ne.s32.totalorder %s244, %s245
      %p257 = scmp.eq.s32.totalorder %s36, 1
      %p258 = por %p256, %p257
      %p260 = scmp.ne.s32.totalorder %s245, %s259
      %p261 = scmp.eq.s32.totalorder %s36, 0
      %p262 = por %p260, %p261
      %s264 = sadd.s32 %s263, 1
      %p267 = scmp.eq.s32.totalorder %s30, 1
      %p268 = scmp.ne.s32.totalorder %s263, %s265
      %p269 = scmp.eq.s32.totalorder %s30, 0
      %p270 = por %p268, %p269
      %p271 = scmp.ne.s32.totalorder %s263, %s265
      %p272 = scmp.eq.s32.totalorder %s35, 1
      %p273 = por %p271, %p272
      %p274 = scmp.ne.s32.totalorder %s265, %s266
      %p275 = scmp.eq.s32.totalorder %s35, 0
      %p276 = por %p274, %p275
      %p277 = scmp.ne.s32.totalorder %s265, %s266
      %p278 = scmp.eq.s32.totalorder %s36, 1
      %p279 = por %p277, %p278
      %p281 = scmp.ne.s32.totalorder %s266, %s280
      %p282 = scmp.eq.s32.totalorder %s36, 0
      %p283 = por %p281, %p282
      %s285 = sadd.s32 %s284, 1
      %p288 = scmp.eq.s32.totalorder %s30, 1
      %p289 = scmp.ne.s32.totalorder %s284, %s286
      %p290 = scmp.eq.s32.totalorder %s30, 0
      %p291 = por %p289, %p290
      %p292 = scmp.ne.s32.totalorder %s284, %s286
      %p293 = scmp.eq.s32.totalorder %s35, 1
      %p294 = por %p292, %p293
      %p295 = scmp.ne.s32.totalorder %s286, %s287
      %p296 = scmp.eq.s32.totalorder %s35, 0
      %p297 = por %p295, %p296
      %p298 = scmp.ne.s32.totalorder %s286, %s287
      %p299 = scmp.eq.s32.totalorder %s36, 1
      %p300 = por %p298, %p299
      %p302 = scmp.ne.s32.totalorder %s287, %s301
      %p303 = scmp.eq.s32.totalorder %s36, 0
      %p304 = por %p302, %p303
      %s306 = sadd.s32 %s305, 1
      %p309 = scmp.eq.s32.totalorder %s30, 1
      %p310 = scmp.ne.s32.totalorder %s305, %s307
      %p311 = scmp.eq.s32.totalorder %s30, 0
      %p312 = por %p310, %p311
      %p313 = scmp.ne.s32.totalorder %s305, %s307
      %p314 = scmp.eq.s32.totalorder %s35, 1
      %p315 = por %p313, %p314
      %p316 = scmp.ne.s32.totalorder %s307, %s308
      %p317 = scmp.eq.s32.totalorder %s35, 0
      %p318 = por %p316, %p317
      %p319 = scmp.ne.s32.totalorder %s307, %s308
      %p320 = scmp.eq.s32.totalorder %s36, 1
      %p321 = por %p319, %p320
      %p323 = scmp.ne.s32.totalorder %s308, %s322
      %p324 = scmp.eq.s32.totalorder %s36, 0
      %p325 = por %p323, %p324
      %s326 = ssub.s32 %s30, %s37
      %p327 = scmp.eq.s32.totalorder %s326, 0
      %s329 = sadd.s32 %s328, 1
      %s330 = scalar_select %p327, %s328, %s329
      %p333 = pneg %p327
      %p334 = scmp.eq.s32.totalorder %s30, 1
      %p335 = por %p333, %p334
      %p336 = scmp.ne.s32.totalorder %s328, %s331
      %p337 = scmp.eq.s32.totalorder %s30, 0
      %p338 = por %p336, %p337
      %p339 = scmp.ne.s32.totalorder %s328, %s331
      %p340 = scmp.eq.s32.totalorder %s35, 1
      %p341 = por %p339, %p340
      %p342 = scmp.ne.s32.totalorder %s331, %s332
      %p343 = scmp.eq.s32.totalorder %s35, 0
      %p344 = por %p342, %p343
      %p345 = scmp.ne.s32.totalorder %s331, %s332
      %p346 = scmp.eq.s32.totalorder %s36, 1
      %p347 = por %p345, %p346
      %p349 = scmp.ne.s32.totalorder %s332, %s348
      %p350 = scmp.eq.s32.totalorder %s36, 0
      %p351 = por %p349, %p350
      %p352 = scmp.le.s32.totalorder 1, %s30
      %p353 = scmp.lt.s32.totalorder %s30, 3
      %p354 = pnand %p352, %p353
      %p355 = pneg %p354
      // Predicated region
      $region9: #{tpu_custom_call.1} parent=5 // pred_check
        _
      $region10: #{tpu_custom_call.1} parent=5 // pred_check_branch
        %357 = sbr.rel (%p354) target = $region12
      $region11: #{tpu_custom_call.1} parent=5 // pred_region
        %s358 = ssub.s32 %s30, 1
        // Predicated region
        $region13: #{tpu_custom_call.1} parent=11 // pred_check
          %p359 = pneg %p129
        $region14: #{tpu_custom_call.1} parent=11 // pred_check_branch
          %361 = sbr.rel (%p359) target = $region16
        $region15: #{tpu_custom_call.1} parent=11 // pred_region
          %s363 = ssub.s32 256, 256
          %364 = vsyncadd [#allocation10], %s363
          %s365 = sshll.u32 [#allocation9], 4
          %s366 = int_to_ptr.vmem [resolvable:$true] %s365
          %371 = dma.hbm_to_vmem [thread:$0]  %s3, 256, %s366, [#allocation10], 64, 64, 4
        $region16: #{tpu_custom_call.1} parent=11 // pred_fallthru
          _
        // Predicated region
        $region17: #{tpu_custom_call.1} parent=11 // pred_check
          %p372 = pneg %p150
        $region18: #{tpu_custom_call.1} parent=11 // pred_check_branch
          %374 = sbr.rel (%p372) target = $region20
        $region19: #{tpu_custom_call.1} parent=11 // pred_region
          _
        $region20: #{tpu_custom_call.1} parent=11 // pred_fallthru
          _
        // Predicated region
        $region21: #{tpu_custom_call.1} parent=11 // pred_check
          %p375 = pneg %p171
        $region22: #{tpu_custom_call.1} parent=11 // pred_check_branch
          %377 = sbr.rel (%p375) target = $region24
        $region23: #{tpu_custom_call.1} parent=11 // pred_region
          _
        $region24: #{tpu_custom_call.1} parent=11 // pred_fallthru
          _
        // Predicated region
        $region25: #{tpu_custom_call.1} parent=11 // pred_check
          %p378 = pneg %p192
        $region26: #{tpu_custom_call.1} parent=11 // pred_check_branch
          %380 = sbr.rel (%p378) target = $region28
        $region27: #{tpu_custom_call.1} parent=11 // pred_region
          _
        $region28: #{tpu_custom_call.1} parent=11 // pred_fallthru
          _
        // Predicated region
        $region29: #{tpu_custom_call.1} parent=11 // pred_check
          %p381 = pneg %p213
        $region30: #{tpu_custom_call.1} parent=11 // pred_check_branch
          %383 = sbr.rel (%p381) target = $region32
        $region31: #{tpu_custom_call.1} parent=11 // pred_region
          %s385 = ssub.s32 256, 256
          %386 = vsyncadd [#allocation10], %s385
          %s387 = sshll.u32 [#allocation11], 4
          %s388 = int_to_ptr.vmem [resolvable:$true] %s387
          %393 = dma.hbm_to_vmem [thread:$0]  %s7, 256, %s388, [#allocation10], 64, 64, 4
        $region32: #{tpu_custom_call.1} parent=11 // pred_fallthru
          _
        // Predicated region
        $region33: #{tpu_custom_call.1} parent=11 // pred_check
          %p394 = pneg %p234
        $region34: #{tpu_custom_call.1} parent=11 // pred_check_branch
          %396 = sbr.rel (%p394) target = $region36
        $region35: #{tpu_custom_call.1} parent=11 // pred_region
          %s398 = ssub.s32 16, 16
          %399 = vsyncadd [#allocation13], %s398
          %s401 = sshll.u32 [#allocation12], 4
          %s402 = int_to_ptr.vmem [resolvable:$true] %s401
          %404 = dma.hbm_to_vmem [thread:$0]  %s8, 16, %s402, [#allocation13]
        $region36: #{tpu_custom_call.1} parent=11 // pred_fallthru
          _
        // Predicated region
        $region37: #{tpu_custom_call.1} parent=11 // pred_check
          %p405 = pneg %p255
        $region38: #{tpu_custom_call.1} parent=11 // pred_check_branch
          %407 = sbr.rel (%p405) target = $region40
        $region39: #{tpu_custom_call.1} parent=11 // pred_region
          _
        $region40: #{tpu_custom_call.1} parent=11 // pred_fallthru
          _
        // Predicated region
        $region41: #{tpu_custom_call.1} parent=11 // pred_check
          %p408 = pneg %p276
        $region42: #{tpu_custom_call.1} parent=11 // pred_check_branch
          %410 = sbr.rel (%p408) target = $region44
        $region43: #{tpu_custom_call.1} parent=11 // pred_region
          _
        $region44: #{tpu_custom_call.1} parent=11 // pred_fallthru
          _
        // Predicated region
        $region45: #{tpu_custom_call.1} parent=11 // pred_check
          %p411 = pneg %p297
        $region46: #{tpu_custom_call.1} parent=11 // pred_check_branch
          %413 = sbr.rel (%p411) target = $region48
        $region47: #{tpu_custom_call.1} parent=11 // pred_region
          _
        $region48: #{tpu_custom_call.1} parent=11 // pred_fallthru
          _
        // Predicated region
        $region49: #{tpu_custom_call.1} parent=11 // pred_check
          %p414 = pneg %p318
        $region50: #{tpu_custom_call.1} parent=11 // pred_check_branch
          %416 = sbr.rel (%p414) target = $region52
        $region51: #{tpu_custom_call.1} parent=11 // pred_region
          _
        $region52: #{tpu_custom_call.1} parent=11 // pred_fallthru
          _
      $region12: #{tpu_custom_call.1} parent=5 // pred_fallthru
        _
      %p417 = scmp.lt.s32.totalorder %s30, 2
      // Predicated region
      $region53: #{tpu_custom_call.1} parent=5 // pred_check
        %p418 = pneg %p417
      $region54: #{tpu_custom_call.1} parent=5 // pred_check_branch
        %420 = sbr.rel (%p418) target = $region56
      $region55: #{tpu_custom_call.1} parent=5 // pred_region
        // Predicated region
        $region57: #{tpu_custom_call.1} parent=55 // pred_check
          %p421 = pneg %p50
        $region58: #{tpu_custom_call.1} parent=55 // pred_check_branch
          %423 = sbr.rel (%p421) target = $region60
        $region59: #{tpu_custom_call.1} parent=55 // pred_region
          %s424 = sand.u32 %s40, 1
          %s425 = scalar_lea.sflag [#allocation4], %s424
          %s426 = sand.u32 %s40, 1
          %s427 = smul.addr %s426, 8
          %s428 = scalar_lea.vmem [#allocation3], %s427
          %s430 = ssub.s32 128, 128
          %431 = vsyncadd %s425, %s430
          %s432 = smul.addr %s30, 128
          %s433 = scalar_lea.hbm %s0, %s432
          %s435 = sshll.u32 %s428, 4
          %s436 = int_to_ptr.vmem [resolvable:$true] %s435
          %438 = dma.hbm_to_vmem [thread:$0]  %s433, 128, %s436, %s425
        $region60: #{tpu_custom_call.1} parent=55 // pred_fallthru
          _
        // Predicated region
        $region61: #{tpu_custom_call.1} parent=55 // pred_check
          %p439 = pneg %p76
        $region62: #{tpu_custom_call.1} parent=55 // pred_check_branch
          %441 = sbr.rel (%p439) target = $region64
        $region63: #{tpu_custom_call.1} parent=55 // pred_region
          %s442 = sand.u32 %s30, 1
          %s443 = scalar_lea.sflag [#allocation7], %s442
          %s444 = sand.u32 %s66, 1
          %s445 = smul.addr %s444, 8
          %s446 = scalar_lea.vmem [#allocation6], %s445
          %s448 = ssub.s32 128, 128
          %449 = vsyncadd %s443, %s448
          %s450 = smul.addr %s30, 128
          %s451 = scalar_lea.hbm %s1, %s450
          %s453 = sshll.u32 %s446, 4
          %s454 = int_to_ptr.vmem [resolvable:$true] %s453
          %456 = dma.hbm_to_vmem [thread:$0]  %s451, 128, %s454, %s443
        $region64: #{tpu_custom_call.1} parent=55 // pred_fallthru
          _
        // Predicated region
        $region65: #{tpu_custom_call.1} parent=55 // pred_check
          %p457 = pneg %p102
        $region66: #{tpu_custom_call.1} parent=55 // pred_check_branch
          %459 = sbr.rel (%p457) target = $region68
        $region67: #{tpu_custom_call.1} parent=55 // pred_region
          %s460 = sand.u32 %s30, 1
          %s461 = scalar_lea.sflag [#allocation7], %s460
          %s462 = sand.u32 %s92, 1
          %s463 = smul.addr %s462, 8
          %s464 = scalar_lea.vmem [#allocation8], %s463
          %s466 = ssub.s32 128, 128
          %467 = vsyncadd %s461, %s466
          %s468 = smul.addr %s30, 128
          %s469 = scalar_lea.hbm %s2, %s468
          %s471 = sshll.u32 %s464, 4
          %s472 = int_to_ptr.vmem [resolvable:$true] %s471
          %474 = dma.hbm_to_vmem [thread:$0]  %s469, 128, %s472, %s461
        $region68: #{tpu_custom_call.1} parent=55 // pred_fallthru
          _
      $region56: #{tpu_custom_call.1} parent=5 // pred_fallthru
        _
      %p475 = scmp.le.s32.totalorder 1, %s30
      %p476 = scmp.lt.s32.totalorder %s30, 3
      %p477 = pnand %p475, %p476
      %p478 = pneg %p477
      // Predicated region
      $region69: #{tpu_custom_call.1} parent=5 // pred_check
        _
      $region70: #{tpu_custom_call.1} parent=5 // pred_check_branch
        %480 = sbr.rel (%p477) target = $region72
      $region71: #{tpu_custom_call.1} parent=5 // pred_region
        %s481 = ssub.s32 %s30, 1
        %s482 = sand.u32 %s43, 1
        %s483 = scalar_lea.sflag [#allocation4], %s482
        %s484 = sand.u32 %s43, 1
        %s485 = smul.addr %s484, 8
        %s486 = scalar_lea.vmem [#allocation3], %s485
        // Predicated region
        $region73: #{tpu_custom_call.1} parent=71 // pred_check
          %p487 = pneg %p56
        $region74: #{tpu_custom_call.1} parent=71 // pred_check_branch
          %489 = sbr.rel (%p487) target = $region76
        $region75: #{tpu_custom_call.1} parent=71 // pred_region
          %490 = dma.done %s483, 128
        $region76: #{tpu_custom_call.1} parent=71 // pred_fallthru
          _
        %s491 = sand.u32 %s35, 1
        %s492 = scalar_lea.sflag [#allocation7], %s491
        %s493 = sand.u32 %s69, 1
        %s494 = smul.addr %s493, 8
        %s495 = scalar_lea.vmem [#allocation6], %s494
        // Predicated region
        $region77: #{tpu_custom_call.1} parent=71 // pred_check
          %p496 = pneg %p82
        $region78: #{tpu_custom_call.1} parent=71 // pred_check_branch
          %498 = sbr.rel (%p496) target = $region80
        $region79: #{tpu_custom_call.1} parent=71 // pred_region
          %499 = dma.done %s492, 128
        $region80: #{tpu_custom_call.1} parent=71 // pred_fallthru
          _
        %s500 = sand.u32 %s35, 1
        %s501 = scalar_lea.sflag [#allocation7], %s500
        %s502 = sand.u32 %s95, 1
        %s503 = smul.addr %s502, 8
        %s504 = scalar_lea.vmem [#allocation8], %s503
        // Predicated region
        $region81: #{tpu_custom_call.1} parent=71 // pred_check
          %p505 = pneg %p108
        $region82: #{tpu_custom_call.1} parent=71 // pred_check_branch
          %507 = sbr.rel (%p505) target = $region84
        $region83: #{tpu_custom_call.1} parent=71 // pred_region
          %508 = dma.done %s501, 128
        $region84: #{tpu_custom_call.1} parent=71 // pred_fallthru
          _
        // Predicated region
        $region85: #{tpu_custom_call.1} parent=71 // pred_check
          %p509 = pneg %p129
        $region86: #{tpu_custom_call.1} parent=71 // pred_check_branch
          %511 = sbr.rel (%p509) target = $region88
        $region87: #{tpu_custom_call.1} parent=71 // pred_region
          %512 = dma.done [#allocation10], 256
        $region88: #{tpu_custom_call.1} parent=71 // pred_fallthru
          _
        // Predicated region
        $region89: #{tpu_custom_call.1} parent=71 // pred_check
          %p513 = pneg %p213
        $region90: #{tpu_custom_call.1} parent=71 // pred_check_branch
          %515 = sbr.rel (%p513) target = $region92
        $region91: #{tpu_custom_call.1} parent=71 // pred_region
          %516 = dma.done [#allocation10], 256
        $region92: #{tpu_custom_call.1} parent=71 // pred_fallthru
          _
        // Predicated region
        $region93: #{tpu_custom_call.1} parent=71 // pred_check
          %p517 = pneg %p234
        $region94: #{tpu_custom_call.1} parent=71 // pred_check_branch
          %519 = sbr.rel (%p517) target = $region96
        $region95: #{tpu_custom_call.1} parent=71 // pred_region
          %520 = dma.done [#allocation13], 16
        $region96: #{tpu_custom_call.1} parent=71 // pred_fallthru
          _
        %s521 = sand.u32 %s43, 1
        %s522 = scalar_lea.sflag [#allocation4], %s521
        %s523 = sand.u32 %s43, 1
        %s524 = smul.addr %s523, 8
        %s525 = scalar_lea.vmem [#allocation3], %s524
        %p526 = pneg %p56
        %p527 = pneg %p53
        %s528 = sand.u32 %s35, 1
        %s529 = scalar_lea.sflag [#allocation7], %s528
        %s530 = sand.u32 %s69, 1
        %s531 = smul.addr %s530, 8
        %s532 = scalar_lea.vmem [#allocation6], %s531
        %p533 = pneg %p82
        %p534 = pneg %p79
        %s535 = sand.u32 %s35, 1
        %s536 = scalar_lea.sflag [#allocation7], %s535
        %s537 = sand.u32 %s95, 1
        %s538 = smul.addr %s537, 8
        %s539 = scalar_lea.vmem [#allocation8], %s538
        %p540 = pneg %p108
        %p541 = pneg %p105
        %p542 = pneg %p129
        %p543 = pneg %p126
        %p544 = pneg %p150
        %p545 = pneg %p147
        %p546 = pneg %p171
        %p547 = pneg %p168
        %p548 = pneg %p192
        %p549 = pneg %p189
        %p550 = pneg %p213
        %p551 = pneg %p210
        %p552 = pneg %p234
        %p553 = pneg %p231
        %p554 = pneg %p255
        %p555 = pneg %p252
        %p556 = pneg %p276
        %p557 = pneg %p273
        %p558 = pneg %p297
        %p559 = pneg %p294
        %p560 = pneg %p318
        %p561 = pneg %p315
        %p562 = pneg %p344
        %p563 = pneg %p341
        %s564 = sand.u32 %s331, 1
        %s565 = scalar_lea.sflag [#allocation5], %s564
        %s566 = sand.u32 %s331, 1
        %s567 = smul.addr %s566, 8
        %s568 = scalar_lea.vmem [#allocation14], %s567
        %v570 = vld [vmem:[%s486] sm:$0xff]
        %v571 = vpack.c.bf16 %v570, %v570
        %v572 = vld [vmem:[%s495] sm:$0xff]
        %v573 = vpack.c.bf16 %v572, %v572
        %v574 = vld [vmem:[%s504] sm:$0xff]
        %v575 = vpack.c.bf16 %v574, %v574
        %v576 = vld [vmem:[#allocation9] sm:$0xf]
        %v577 = vld [vmem:[#allocation9 + $0x4] sm:$0xf]
        %v578 = vld [vmem:[#allocation9 + $0x8] sm:$0xf]
        %v579 = vld [vmem:[#allocation9 + $0xc] sm:$0xf]
        %v580 = vld [vmem:[%s4] sm:$0x1]
        %v582 = vlaneseq
        %v583 = vshrl.u32 %v582, 7
        %v584 = vsub.s32 0, %v583
        %v585 = vrot.slane %v580, %v584
        %v591 = vunpack.c.l.b16 %v576
        %v592 = vunpack.c.l.b16 %v577
        %v593 = vunpack.c.l.b16 %v578
        %v594 = vunpack.c.l.b16 %v579
        %v595 = vpack.c.b16 %v592, %v591
        %v596 = vpack.c.b16 %v594, %v593
        %vm597 = vcmask 261120
        %v599 = vsel %vm597, %v571, 0
        %v602 = vsel %vm597, %v595, 0
        %v605 = vsel %vm597, %v596, 0
        %607 = vmatprep.subr.bf16.mxu0 0
        %608 = vmatpush1.bf16.xpose.msra.mxu0 %v602
        %609 = vmatprep.subr.bf16.mxu0 0
        %610 = vmatpush1.bf16.xpose.msra.mxu0 %v605
        %611 = vmatprep.subr.bf16.mxu0 0
        %612 = vmatpush1.bf16.xpose.msra.mxu0 0
        %613 = vmatprep.subr.bf16.mxu0 0
        %614 = vmatpush1.bf16.xpose.msra.mxu0 0
        %615 = vmatprep.subr.bf16.mxu0 0
        %616 = vmatpush1.bf16.xpose.msra.mxu0 0
        %617 = vmatprep.subr.bf16.mxu0 0
        %618 = vmatpush1.bf16.xpose.msra.mxu0 0
        %619 = vmatprep.subr.bf16.mxu0 0
        %620 = vmatpush1.bf16.xpose.msra.mxu0 0
        %621 = vmatprep.subr.bf16.mxu0 0
        %622 = vmatpush1.bf16.xpose.msra.mxu0 0
        %623 = vmatprep.subr.bf16.mxu0 0
        %624 = vmatpush1.bf16.xpose.msra.mxu0 0
        %625 = vmatprep.subr.bf16.mxu0 0
        %626 = vmatpush1.bf16.xpose.msra.mxu0 0
        %627 = vmatprep.subr.bf16.mxu0 0
        %628 = vmatpush1.bf16.xpose.msra.mxu0 0
        %629 = vmatprep.subr.bf16.mxu0 0
        %630 = vmatpush1.bf16.xpose.msra.mxu0 0
        %631 = vmatprep.subr.bf16.mxu0 0
        %632 = vmatpush1.bf16.xpose.msra.mxu0 0
        %633 = vmatprep.subr.bf16.mxu0 0
        %634 = vmatpush1.bf16.xpose.msra.mxu0 0
        %635 = vmatprep.subr.bf16.mxu0 0
        %636 = vmatpush1.bf16.xpose.msra.mxu0 0
        %637 = vmatprep.subr.bf16.mxu0 0
        %638 = vmatpush1.bf16.xpose.msra.mxu0 0
        %639 = vmatprep.mubr.bf16.mxu0 0
        %640 = vmatmul.mubr.bf16.gmra.mrb[0].mxu0 %v599
        %v641 = vpop.f32.mrb[0].mxu0
        %v642 = vadd.f32 %v585, %v641
        %v643 = vpop.f32.mrb[0].mxu0
        %v644 = vpop.f32.mrb[0].mxu0
        %v645 = vpop.f32.mrb[0].mxu0
        %646 = vdwg.mxu0
        %v647 = vld [vmem:[%s5] sm:$0xf]
        %v648 = vld [vmem:[%s5 + $0x4] sm:$0xf]
        %v649 = vld [vmem:[%s5 + $0x8] sm:$0xf]
        %v650 = vld [vmem:[%s5 + $0xc] sm:$0xf]
        %v651 = vld [vmem:[%s6] sm:$0x1]
        %v653 = vlaneseq
        %v654 = vshrl.u32 %v653, 7
        %v655 = vsub.s32 0, %v654
        %v656 = vrot.slane %v651, %v655
        %v662 = vunpack.c.l.b16 %v647
        %v663 = vunpack.c.l.b16 %v648
        %v664 = vunpack.c.l.b16 %v649
        %v665 = vunpack.c.l.b16 %v650
        %v666 = vpack.c.b16 %v663, %v662
        %v667 = vpack.c.b16 %v665, %v664
        %v669 = vsel %vm597, %v573, 0
        %v672 = vsel %vm597, %v666, 0
        %v675 = vsel %vm597, %v667, 0
        %677 = vmatprep.subr.bf16.mxu0 0
        %678 = vmatpush1.bf16.xpose.msra.mxu0 %v672
        %679 = vmatprep.subr.bf16.mxu0 0
        %680 = vmatpush1.bf16.xpose.msra.mxu0 %v675
        %681 = vmatprep.subr.bf16.mxu0 0
        %682 = vmatpush1.bf16.xpose.msra.mxu0 0
        %683 = vmatprep.subr.bf16.mxu0 0
        %684 = vmatpush1.bf16.xpose.msra.mxu0 0
        %685 = vmatprep.subr.bf16.mxu0 0
        %686 = vmatpush1.bf16.xpose.msra.mxu0 0
        %687 = vmatprep.subr.bf16.mxu0 0
        %688 = vmatpush1.bf16.xpose.msra.mxu0 0
        %689 = vmatprep.subr.bf16.mxu0 0
        %690 = vmatpush1.bf16.xpose.msra.mxu0 0
        %691 = vmatprep.subr.bf16.mxu0 0
        %692 = vmatpush1.bf16.xpose.msra.mxu0 0
        %693 = vmatprep.subr.bf16.mxu0 0
        %694 = vmatpush1.bf16.xpose.msra.mxu0 0
        %695 = vmatprep.subr.bf16.mxu0 0
        %696 = vmatpush1.bf16.xpose.msra.mxu0 0
        %697 = vmatprep.subr.bf16.mxu0 0
        %698 = vmatpush1.bf16.xpose.msra.mxu0 0
        %699 = vmatprep.subr.bf16.mxu0 0
        %700 = vmatpush1.bf16.xpose.msra.mxu0 0
        %701 = vmatprep.subr.bf16.mxu0 0
        %702 = vmatpush1.bf16.xpose.msra.mxu0 0
        %703 = vmatprep.subr.bf16.mxu0 0
        %704 = vmatpush1.bf16.xpose.msra.mxu0 0
        %705 = vmatprep.subr.bf16.mxu0 0
        %706 = vmatpush1.bf16.xpose.msra.mxu0 0
        %707 = vmatprep.subr.bf16.mxu0 0
        %708 = vmatpush1.bf16.xpose.msra.mxu0 0
        %709 = vmatprep.mubr.bf16.mxu0 0
        %710 = vmatmul.mubr.bf16.gmra.mrb[0].mxu0 %v669
        %v711 = vpop.f32.mrb[0].mxu0
        %v712 = vadd.f32 %v656, %v711
        %v713 = vpop.f32.mrb[0].mxu0
        %v714 = vpop.f32.mrb[0].mxu0
        %v715 = vpop.f32.mrb[0].mxu0
        %716 = vdwg.mxu0
        %v717 = vld [vmem:[#allocation11] sm:$0xf]
        %v718 = vld [vmem:[#allocation11 + $0x4] sm:$0xf]
        %v719 = vld [vmem:[#allocation11 + $0x8] sm:$0xf]
        %v720 = vld [vmem:[#allocation11 + $0xc] sm:$0xf]
        %v721 = vld [vmem:[#allocation12] sm:$0x1]
        %v723 = vlaneseq
        %v724 = vshrl.u32 %v723, 7
        %v725 = vsub.s32 0, %v724
        %v726 = vrot.slane %v721, %v725
        %v732 = vunpack.c.l.b16 %v717
        %v733 = vunpack.c.l.b16 %v718
        %v734 = vunpack.c.l.b16 %v719
        %v735 = vunpack.c.l.b16 %v720
        %v736 = vpack.c.b16 %v733, %v732
        %v737 = vpack.c.b16 %v735, %v734
        %v739 = vsel %vm597, %v575, 0
        %v742 = vsel %vm597, %v736, 0
        %v745 = vsel %vm597, %v737, 0
        %747 = vmatprep.subr.bf16.mxu0 0
        %748 = vmatpush1.bf16.xpose.msra.mxu0 %v742
        %749 = vmatprep.subr.bf16.mxu0 0
        %750 = vmatpush1.bf16.xpose.msra.mxu0 %v745
        %751 = vmatprep.subr.bf16.mxu0 0
        %752 = vmatpush1.bf16.xpose.msra.mxu0 0
        %753 = vmatprep.subr.bf16.mxu0 0
        %754 = vmatpush1.bf16.xpose.msra.mxu0 0
        %755 = vmatprep.subr.bf16.mxu0 0
        %756 = vmatpush1.bf16.xpose.msra.mxu0 0
        %757 = vmatprep.subr.bf16.mxu0 0
        %758 = vmatpush1.bf16.xpose.msra.mxu0 0
        %759 = vmatprep.subr.bf16.mxu0 0
        %760 = vmatpush1.bf16.xpose.msra.mxu0 0
        %761 = vmatprep.subr.bf16.mxu0 0
        %762 = vmatpush1.bf16.xpose.msra.mxu0 0
        %763 = vmatprep.subr.bf16.mxu0 0
        %764 = vmatpush1.bf16.xpose.msra.mxu0 0
        %765 = vmatprep.subr.bf16.mxu0 0
        %766 = vmatpush1.bf16.xpose.msra.mxu0 0
        %767 = vmatprep.subr.bf16.mxu0 0
        %768 = vmatpush1.bf16.xpose.msra.mxu0 0
        %769 = vmatprep.subr.bf16.mxu0 0
        %770 = vmatpush1.bf16.xpose.msra.mxu0 0
        %771 = vmatprep.subr.bf16.mxu0 0
        %772 = vmatpush1.bf16.xpose.msra.mxu0 0
        %773 = vmatprep.subr.bf16.mxu0 0
        %774 = vmatpush1.bf16.xpose.msra.mxu0 0
        %775 = vmatprep.subr.bf16.mxu0 0
        %776 = vmatpush1.bf16.xpose.msra.mxu0 0
        %777 = vmatprep.subr.bf16.mxu0 0
        %778 = vmatpush1.bf16.xpose.msra.mxu0 0
        %779 = vmatprep.mubr.bf16.mxu0 0
        %780 = vmatmul.mubr.bf16.gmra.mrb[0].mxu0 %v739
        %v781 = vpop.f32.mrb[0].mxu0
        %v782 = vadd.f32 %v726, %v781
        %v783 = vpop.f32.mrb[0].mxu0
        %v784 = vpop.f32.mrb[0].mxu0
        %v785 = vpop.f32.mrb[0].mxu0
        %786 = vdwg.mxu0
        %788 = vrot.lane.b32.xlu0 %v642, 120
        %v789 = vpop.permute.xlu0 %788
        %791 = vrot.lane.b32.xlu0 %v642, 112
        %v792 = vpop.permute.xlu0 %791
        %794 = vrot.lane.b32.xlu0 %v642, 104
        %v795 = vpop.permute.xlu0 %794
        %v797 = vpack.c.bf16 %v642, %v642
        %v798 = vpack.c.bf16 %v789, %v789
        %v799 = vpack.c.bf16 %v792, %v792
        %v800 = vpack.c.bf16 %v795, %v795
        %802 = vrot.lane.b32.xlu0 %v712, 120
        %v803 = vpop.permute.xlu0 %802
        %805 = vrot.lane.b32.xlu0 %v712, 112
        %v806 = vpop.permute.xlu0 %805
        %808 = vrot.lane.b32.xlu0 %v712, 104
        %v809 = vpop.permute.xlu0 %808
        %v811 = vpack.c.bf16 %v712, %v712
        %v812 = vpack.c.bf16 %v803, %v803
        %v813 = vpack.c.bf16 %v806, %v806
        %v814 = vpack.c.bf16 %v809, %v809
        %816 = vrot.lane.b32.xlu0 %v782, 120
        %v817 = vpop.permute.xlu0 %816
        %819 = vrot.lane.b32.xlu0 %v782, 112
        %v820 = vpop.permute.xlu0 %819
        %822 = vrot.lane.b32.xlu0 %v782, 104
        %v823 = vpop.permute.xlu0 %822
        %v825 = vpack.c.bf16 %v782, %v782
        %v826 = vpack.c.bf16 %v817, %v817
        %v827 = vpack.c.bf16 %v820, %v820
        %v828 = vpack.c.bf16 %v823, %v823
        %vm829 = vcmask 64512
        %v831 = vsel %vm829, %v797, 0
        %v834 = vsel %vm829, %v811, 0
        %836 = vmatprep.subr.bf16.mxu0 0
        %837 = vmatpush1.bf16.xpose.msra.mxu0 %v834
        %838 = vmatprep.subr.bf16.mxu0 0
        %839 = vmatpush1.bf16.xpose.msra.mxu0 0
        %840 = vmatprep.subr.bf16.mxu0 0
        %841 = vmatpush1.bf16.xpose.msra.mxu0 0
        %842 = vmatprep.subr.bf16.mxu0 0
        %843 = vmatpush1.bf16.xpose.msra.mxu0 0
        %844 = vmatprep.subr.bf16.mxu0 0
        %845 = vmatpush1.bf16.xpose.msra.mxu0 0
        %846 = vmatprep.subr.bf16.mxu0 0
        %847 = vmatpush1.bf16.xpose.msra.mxu0 0
        %848 = vmatprep.subr.bf16.mxu0 0
        %849 = vmatpush1.bf16.xpose.msra.mxu0 0
        %850 = vmatprep.subr.bf16.mxu0 0
        %851 = vmatpush1.bf16.xpose.msra.mxu0 0
        %852 = vmatprep.subr.bf16.mxu0 0
        %853 = vmatpush1.bf16.xpose.msra.mxu0 0
        %854 = vmatprep.subr.bf16.mxu0 0
        %855 = vmatpush1.bf16.xpose.msra.mxu0 0
        %856 = vmatprep.subr.bf16.mxu0 0
        %857 = vmatpush1.bf16.xpose.msra.mxu0 0
        %858 = vmatprep.subr.bf16.mxu0 0
        %859 = vmatpush1.bf16.xpose.msra.mxu0 0
        %860 = vmatprep.subr.bf16.mxu0 0
        %861 = vmatpush1.bf16.xpose.msra.mxu0 0
        %862 = vmatprep.subr.bf16.mxu0 0
        %863 = vmatpush1.bf16.xpose.msra.mxu0 0
        %864 = vmatprep.subr.bf16.mxu0 0
        %865 = vmatpush1.bf16.xpose.msra.mxu0 0
        %866 = vmatprep.subr.bf16.mxu0 0
        %867 = vmatpush1.bf16.xpose.msra.mxu0 0
        %868 = vmatprep.mubr.bf16.mxu0 0
        %869 = vmatmul.mubr.bf16.gmra.mrb[0].mxu0 %v831
        %v870 = vpop.f32.mrb[0].mxu0
        %v871 = vadd.f32 0.0, %v870
        %v872 = vpop.f32.mrb[0].mxu0
        %v873 = vpop.f32.mrb[0].mxu0
        %v874 = vpop.f32.mrb[0].mxu0
        %875 = vdwg.mxu0
        %v877 = vsel %vm829, %v798, 0
        %v880 = vsel %vm829, %v812, 0
        %882 = vmatprep.subr.bf16.mxu0 0
        %883 = vmatpush1.bf16.xpose.msra.mxu0 %v880
        %884 = vmatprep.subr.bf16.mxu0 0
        %885 = vmatpush1.bf16.xpose.msra.mxu0 0
        %886 = vmatprep.subr.bf16.mxu0 0
        %887 = vmatpush1.bf16.xpose.msra.mxu0 0
        %888 = vmatprep.subr.bf16.mxu0 0
        %889 = vmatpush1.bf16.xpose.msra.mxu0 0
        %890 = vmatprep.subr.bf16.mxu0 0
        %891 = vmatpush1.bf16.xpose.msra.mxu0 0
        %892 = vmatprep.subr.bf16.mxu0 0
        %893 = vmatpush1.bf16.xpose.msra.mxu0 0
        %894 = vmatprep.subr.bf16.mxu0 0
        %895 = vmatpush1.bf16.xpose.msra.mxu0 0
        %896 = vmatprep.subr.bf16.mxu0 0
        %897 = vmatpush1.bf16.xpose.msra.mxu0 0
        %898 = vmatprep.subr.bf16.mxu0 0
        %899 = vmatpush1.bf16.xpose.msra.mxu0 0
        %900 = vmatprep.subr.bf16.mxu0 0
        %901 = vmatpush1.bf16.xpose.msra.mxu0 0
        %902 = vmatprep.subr.bf16.mxu0 0
        %903 = vmatpush1.bf16.xpose.msra.mxu0 0
        %904 = vmatprep.subr.bf16.mxu0 0
        %905 = vmatpush1.bf16.xpose.msra.mxu0 0
        %906 = vmatprep.subr.bf16.mxu0 0
        %907 = vmatpush1.bf16.xpose.msra.mxu0 0
        %908 = vmatprep.subr.bf16.mxu0 0
        %909 = vmatpush1.bf16.xpose.msra.mxu0 0
        %910 = vmatprep.subr.bf16.mxu0 0
        %911 = vmatpush1.bf16.xpose.msra.mxu0 0
        %912 = vmatprep.subr.bf16.mxu0 0
        %913 = vmatpush1.bf16.xpose.msra.mxu0 0
        %914 = vmatprep.mubr.bf16.mxu0 0
        %915 = vmatmul.mubr.bf16.gmra.mrb[0].mxu0 %v877
        %v916 = vpop.f32.mrb[0].mxu0
        %v917 = vadd.f32 0.0, %v916
        %v918 = vpop.f32.mrb[0].mxu0
        %v919 = vpop.f32.mrb[0].mxu0
        %v920 = vpop.f32.mrb[0].mxu0
        %921 = vdwg.mxu0
        %v923 = vsel %vm829, %v799, 0
        %v926 = vsel %vm829, %v813, 0
        %928 = vmatprep.subr.bf16.mxu0 0
        %929 = vmatpush1.bf16.xpose.msra.mxu0 %v926
        %930 = vmatprep.subr.bf16.mxu0 0
        %931 = vmatpush1.bf16.xpose.msra.mxu0 0
        %932 = vmatprep.subr.bf16.mxu0 0
        %933 = vmatpush1.bf16.xpose.msra.mxu0 0
        %934 = vmatprep.subr.bf16.mxu0 0
        %935 = vmatpush1.bf16.xpose.msra.mxu0 0
        %936 = vmatprep.subr.bf16.mxu0 0
        %937 = vmatpush1.bf16.xpose.msra.mxu0 0
        %938 = vmatprep.subr.bf16.mxu0 0
        %939 = vmatpush1.bf16.xpose.msra.mxu0 0
        %940 = vmatprep.subr.bf16.mxu0 0
        %941 = vmatpush1.bf16.xpose.msra.mxu0 0
        %942 = vmatprep.subr.bf16.mxu0 0
        %943 = vmatpush1.bf16.xpose.msra.mxu0 0
        %944 = vmatprep.subr.bf16.mxu0 0
        %945 = vmatpush1.bf16.xpose.msra.mxu0 0
        %946 = vmatprep.subr.bf16.mxu0 0
        %947 = vmatpush1.bf16.xpose.msra.mxu0 0
        %948 = vmatprep.subr.bf16.mxu0 0
        %949 = vmatpush1.bf16.xpose.msra.mxu0 0
        %950 = vmatprep.subr.bf16.mxu0 0
        %951 = vmatpush1.bf16.xpose.msra.mxu0 0
        %952 = vmatprep.subr.bf16.mxu0 0
        %953 = vmatpush1.bf16.xpose.msra.mxu0 0
        %954 = vmatprep.subr.bf16.mxu0 0
        %955 = vmatpush1.bf16.xpose.msra.mxu0 0
        %956 = vmatprep.subr.bf16.mxu0 0
        %957 = vmatpush1.bf16.xpose.msra.mxu0 0
        %958 = vmatprep.subr.bf16.mxu0 0
        %959 = vmatpush1.bf16.xpose.msra.mxu0 0
        %960 = vmatprep.mubr.bf16.mxu0 0
        %961 = vmatmul.mubr.bf16.gmra.mrb[0].mxu0 %v923
        %v962 = vpop.f32.mrb[0].mxu0
        %v963 = vadd.f32 0.0, %v962
        %v964 = vpop.f32.mrb[0].mxu0
        %v965 = vpop.f32.mrb[0].mxu0
        %v966 = vpop.f32.mrb[0].mxu0
        %967 = vdwg.mxu0
        %v969 = vsel %vm829, %v800, 0
        %v972 = vsel %vm829, %v814, 0
        %974 = vmatprep.subr.bf16.mxu0 0
        %975 = vmatpush1.bf16.xpose.msra.mxu0 %v972
        %976 = vmatprep.subr.bf16.mxu0 0
        %977 = vmatpush1.bf16.xpose.msra.mxu0 0
        %978 = vmatprep.subr.bf16.mxu0 0
        %979 = vmatpush1.bf16.xpose.msra.mxu0 0
        %980 = vmatprep.subr.bf16.mxu0 0
        %981 = vmatpush1.bf16.xpose.msra.mxu0 0
        %982 = vmatprep.subr.bf16.mxu0 0
        %983 = vmatpush1.bf16.xpose.msra.mxu0 0
        %984 = vmatprep.subr.bf16.mxu0 0
        %985 = vmatpush1.bf16.xpose.msra.mxu0 0
        %986 = vmatprep.subr.bf16.mxu0 0
        %987 = vmatpush1.bf16.xpose.msra.mxu0 0
        %988 = vmatprep.subr.bf16.mxu0 0
        %989 = vmatpush1.bf16.xpose.msra.mxu0 0
        %990 = vmatprep.subr.bf16.mxu0 0
        %991 = vmatpush1.bf16.xpose.msra.mxu0 0
        %992 = vmatprep.subr.bf16.mxu0 0
        %993 = vmatpush1.bf16.xpose.msra.mxu0 0
        %994 = vmatprep.subr.bf16.mxu0 0
        %995 = vmatpush1.bf16.xpose.msra.mxu0 0
        %996 = vmatprep.subr.bf16.mxu0 0
        %997 = vmatpush1.bf16.xpose.msra.mxu0 0
        %998 = vmatprep.subr.bf16.mxu0 0
        %999 = vmatpush1.bf16.xpose.msra.mxu0 0
        %1000 = vmatprep.subr.bf16.mxu0 0
        %1001 = vmatpush1.bf16.xpose.msra.mxu0 0
        %1002 = vmatprep.subr.bf16.mxu0 0
        %1003 = vmatpush1.bf16.xpose.msra.mxu0 0
        %1004 = vmatprep.subr.bf16.mxu0 0
        %1005 = vmatpush1.bf16.xpose.msra.mxu0 0
        %1006 = vmatprep.mubr.bf16.mxu0 0
        %1007 = vmatmul.mubr.bf16.gmra.mrb[0].mxu0 %v969
        %v1008 = vpop.f32.mrb[0].mxu0
        %v1009 = vadd.f32 0.0, %v1008
        %v1010 = vpop.f32.mrb[0].mxu0
        %v1011 = vpop.f32.mrb[0].mxu0
        %v1012 = vpop.f32.mrb[0].mxu0
        %1013 = vdwg.mxu0
        %v1014 = vmul.f32 %v871, 0.35355338
        %v1015 = vmul.f32 %v917, 0.35355338
        %v1016 = vmul.f32 %v963, 0.35355338
        %v1017 = vmul.f32 %v1009, 0.35355338
        %v1018 = vsel %vm829, %v1014, -inf
        %1019 = vmax.xlane.f32.xlu0 %v1018
        %v1020 = vpop.xlane.xlu0 %1019
        %v1021 = vsel %vm829, %v1015, -inf
        %1022 = vmax.xlane.f32.xlu0 %v1021
        %v1023 = vpop.xlane.xlu0 %1022
        %v1024 = vsel %vm829, %v1016, -inf
        %1025 = vmax.xlane.f32.xlu0 %v1024
        %v1026 = vpop.xlane.xlu0 %1025
        %v1027 = vsel %vm829, %v1017, -inf
        %1028 = vmax.xlane.f32.xlu0 %v1027
        %v1029 = vpop.xlane.xlu0 %1028
        %v1030 = vsub.f32 %v1014, %v1020
        %v1031 = vsub.f32 %v1015, %v1023
        %v1032 = vsub.f32 %v1016, %v1026
        %v1033 = vsub.f32 %v1017, %v1029
        %v1034 = vmul.f32 %v1030, 1.442695
        %v1035 = vpow.pop %v1034
        %v1036 = vmul.f32 %v1031, 1.442695
        %v1037 = vpow.pop %v1036
        %v1038 = vmul.f32 %v1032, 1.442695
        %v1039 = vpow.pop %v1038
        %v1040 = vmul.f32 %v1033, 1.442695
        %v1041 = vpow.pop %v1040
        %v1042 = vsel %vm829, %v1035, 0.0
        %1043 = vadd.xlane.f32.xlu0 %v1042
        %v1044 = vpop.xlane.xlu0 %1043
        %v1045 = vsel %vm829, %v1037, 0.0
        %1046 = vadd.xlane.f32.xlu0 %v1045
        %v1047 = vpop.xlane.xlu0 %1046
        %v1048 = vsel %vm829, %v1039, 0.0
        %1049 = vadd.xlane.f32.xlu0 %v1048
        %v1050 = vpop.xlane.xlu0 %1049
        %v1051 = vsel %vm829, %v1041, 0.0
        %1052 = vadd.xlane.f32.xlu0 %v1051
        %v1053 = vpop.xlane.xlu0 %1052
        %v1054 = vrcp.pop %v1044
        %v1055 = vmul.f32 %v1035, %v1054
        %v1056 = vrcp.pop %v1047
        %v1057 = vmul.f32 %v1037, %v1056
        %v1058 = vrcp.pop %v1050
        %v1059 = vmul.f32 %v1039, %v1058
        %v1060 = vrcp.pop %v1053
        %v1061 = vmul.f32 %v1041, %v1060
        %v1062 = vpack.c.bf16 %v1055, %v1055
        %v1063 = vpack.c.bf16 %v1057, %v1057
        %v1064 = vpack.c.bf16 %v1059, %v1059
        %v1065 = vpack.c.bf16 %v1061, %v1061
        %v1067 = vsel %vm829, %v1062, 0
        %vm1069 = vcmask 1043456
        %v1071 = vsel %vm1069, %v825, 0
        %1073 = vmatprep.subr.bf16.mxu0 0
        %1074 = vmatpush1.bf16.msra.mxu0 %v1071
        %1075 = vmatprep.subr.bf16.mxu0 0
        %1076 = vmatpush1.bf16.msra.mxu0 0
        %1077 = vmatprep.subr.bf16.mxu0 0
        %1078 = vmatpush1.bf16.msra.mxu0 0
        %1079 = vmatprep.subr.bf16.mxu0 0
        %1080 = vmatpush1.bf16.msra.mxu0 0
        %1081 = vmatprep.subr.bf16.mxu0 0
        %1082 = vmatpush1.bf16.msra.mxu0 0
        %1083 = vmatprep.subr.bf16.mxu0 0
        %1084 = vmatpush1.bf16.msra.mxu0 0
        %1085 = vmatprep.subr.bf16.mxu0 0
        %1086 = vmatpush1.bf16.msra.mxu0 0
        %1087 = vmatprep.subr.bf16.mxu0 0
        %1088 = vmatpush1.bf16.msra.mxu0 0
        %1089 = vmatprep.subr.bf16.mxu0 0
        %1090 = vmatpush1.bf16.msra.mxu0 0
        %1091 = vmatprep.subr.bf16.mxu0 0
        %1092 = vmatpush1.bf16.msra.mxu0 0
        %1093 = vmatprep.subr.bf16.mxu0 0
        %1094 = vmatpush1.bf16.msra.mxu0 0
        %1095 = vmatprep.subr.bf16.mxu0 0
        %1096 = vmatpush1.bf16.msra.mxu0 0
        %1097 = vmatprep.subr.bf16.mxu0 0
        %1098 = vmatpush1.bf16.msra.mxu0 0
        %1099 = vmatprep.subr.bf16.mxu0 0
        %1100 = vmatpush1.bf16.msra.mxu0 0
        %1101 = vmatprep.subr.bf16.mxu0 0
        %1102 = vmatpush1.bf16.msra.mxu0 0
        %1103 = vmatprep.subr.bf16.mxu0 0
        %1104 = vmatpush1.bf16.msra.mxu0 0
        %1105 = vmatprep.mubr.bf16.mxu0 0
        %1106 = vmatmul.mubr.bf16.gmra.mrb[0].mxu0 %v1067
        %v1107 = vpop.f32.mrb[0].mxu0
        %v1108 = vadd.f32 0.0, %v1107
        %v1109 = vpop.f32.mrb[0].mxu0
        %v1110 = vpop.f32.mrb[0].mxu0
        %v1111 = vpop.f32.mrb[0].mxu0
        %1112 = vdwg.mxu0
        %v1114 = vsel %vm829, %v1063, 0
        %v1117 = vsel %vm1069, %v826, 0
        %1119 = vmatprep.subr.bf16.mxu0 0
        %1120 = vmatpush1.bf16.msra.mxu0 %v1117
        %1121 = vmatprep.subr.bf16.mxu0 0
        %1122 = vmatpush1.bf16.msra.mxu0 0
        %1123 = vmatprep.subr.bf16.mxu0 0
        %1124 = vmatpush1.bf16.msra.mxu0 0
        %1125 = vmatprep.subr.bf16.mxu0 0
        %1126 = vmatpush1.bf16.msra.mxu0 0
        %1127 = vmatprep.subr.bf16.mxu0 0
        %1128 = vmatpush1.bf16.msra.mxu0 0
        %1129 = vmatprep.subr.bf16.mxu0 0
        %1130 = vmatpush1.bf16.msra.mxu0 0
        %1131 = vmatprep.subr.bf16.mxu0 0
        %1132 = vmatpush1.bf16.msra.mxu0 0
        %1133 = vmatprep.subr.bf16.mxu0 0
        %1134 = vmatpush1.bf16.msra.mxu0 0
        %1135 = vmatprep.subr.bf16.mxu0 0
        %1136 = vmatpush1.bf16.msra.mxu0 0
        %1137 = vmatprep.subr.bf16.mxu0 0
        %1138 = vmatpush1.bf16.msra.mxu0 0
        %1139 = vmatprep.subr.bf16.mxu0 0
        %1140 = vmatpush1.bf16.msra.mxu0 0
        %1141 = vmatprep.subr.bf16.mxu0 0
        %1142 = vmatpush1.bf16.msra.mxu0 0
        %1143 = vmatprep.subr.bf16.mxu0 0
        %1144 = vmatpush1.bf16.msra.mxu0 0
        %1145 = vmatprep.subr.bf16.mxu0 0
        %1146 = vmatpush1.bf16.msra.mxu0 0
        %1147 = vmatprep.subr.bf16.mxu0 0
        %1148 = vmatpush1.bf16.msra.mxu0 0
        %1149 = vmatprep.subr.bf16.mxu0 0
        %1150 = vmatpush1.bf16.msra.mxu0 0
        %1151 = vmatprep.mubr.bf16.mxu0 0
        %1152 = vmatmul.mubr.bf16.gmra.mrb[0].mxu0 %v1114
        %v1153 = vpop.f32.mrb[0].mxu0
        %v1154 = vadd.f32 0.0, %v1153
        %v1155 = vpop.f32.mrb[0].mxu0
        %v1156 = vpop.f32.mrb[0].mxu0
        %v1157 = vpop.f32.mrb[0].mxu0
        %1158 = vdwg.mxu0
        %v1160 = vsel %vm829, %v1064, 0
        %v1163 = vsel %vm1069, %v827, 0
        %1165 = vmatprep.subr.bf16.mxu0 0
        %1166 = vmatpush1.bf16.msra.mxu0 %v1163
        %1167 = vmatprep.subr.bf16.mxu0 0
        %1168 = vmatpush1.bf16.msra.mxu0 0
        %1169 = vmatprep.subr.bf16.mxu0 0
        %1170 = vmatpush1.bf16.msra.mxu0 0
        %1171 = vmatprep.subr.bf16.mxu0 0
        %1172 = vmatpush1.bf16.msra.mxu0 0
        %1173 = vmatprep.subr.bf16.mxu0 0
        %1174 = vmatpush1.bf16.msra.mxu0 0
        %1175 = vmatprep.subr.bf16.mxu0 0
        %1176 = vmatpush1.bf16.msra.mxu0 0
        %1177 = vmatprep.subr.bf16.mxu0 0
        %1178 = vmatpush1.bf16.msra.mxu0 0
        %1179 = vmatprep.subr.bf16.mxu0 0
        %1180 = vmatpush1.bf16.msra.mxu0 0
        %1181 = vmatprep.subr.bf16.mxu0 0
        %1182 = vmatpush1.bf16.msra.mxu0 0
        %1183 = vmatprep.subr.bf16.mxu0 0
        %1184 = vmatpush1.bf16.msra.mxu0 0
        %1185 = vmatprep.subr.bf16.mxu0 0
        %1186 = vmatpush1.bf16.msra.mxu0 0
        %1187 = vmatprep.subr.bf16.mxu0 0
        %1188 = vmatpush1.bf16.msra.mxu0 0
        %1189 = vmatprep.subr.bf16.mxu0 0
        %1190 = vmatpush1.bf16.msra.mxu0 0
        %1191 = vmatprep.subr.bf16.mxu0 0
        %1192 = vmatpush1.bf16.msra.mxu0 0
        %1193 = vmatprep.subr.bf16.mxu0 0
        %1194 = vmatpush1.bf16.msra.mxu0 0
        %1195 = vmatprep.subr.bf16.mxu0 0
        %1196 = vmatpush1.bf16.msra.mxu0 0
        %1197 = vmatprep.mubr.bf16.mxu0 0
        %1198 = vmatmul.mubr.bf16.gmra.mrb[0].mxu0 %v1160
        %v1199 = vpop.f32.mrb[0].mxu0
        %v1200 = vadd.f32 0.0, %v1199
        %v1201 = vpop.f32.mrb[0].mxu0
        %v1202 = vpop.f32.mrb[0].mxu0
        %v1203 = vpop.f32.mrb[0].mxu0
        %1204 = vdwg.mxu0
        %v1206 = vsel %vm829, %v1065, 0
        %v1209 = vsel %vm1069, %v828, 0
        %1211 = vmatprep.subr.bf16.mxu0 0
        %1212 = vmatpush1.bf16.msra.mxu0 %v1209
        %1213 = vmatprep.subr.bf16.mxu0 0
        %1214 = vmatpush1.bf16.msra.mxu0 0
        %1215 = vmatprep.subr.bf16.mxu0 0
        %1216 = vmatpush1.bf16.msra.mxu0 0
        %1217 = vmatprep.subr.bf16.mxu0 0
        %1218 = vmatpush1.bf16.msra.mxu0 0
        %1219 = vmatprep.subr.bf16.mxu0 0
        %1220 = vmatpush1.bf16.msra.mxu0 0
        %1221 = vmatprep.subr.bf16.mxu0 0
        %1222 = vmatpush1.bf16.msra.mxu0 0
        %1223 = vmatprep.subr.bf16.mxu0 0
        %1224 = vmatpush1.bf16.msra.mxu0 0
        %1225 = vmatprep.subr.bf16.mxu0 0
        %1226 = vmatpush1.bf16.msra.mxu0 0
        %1227 = vmatprep.subr.bf16.mxu0 0
        %1228 = vmatpush1.bf16.msra.mxu0 0
        %1229 = vmatprep.subr.bf16.mxu0 0
        %1230 = vmatpush1.bf16.msra.mxu0 0
        %1231 = vmatprep.subr.bf16.mxu0 0
        %1232 = vmatpush1.bf16.msra.mxu0 0
        %1233 = vmatprep.subr.bf16.mxu0 0
        %1234 = vmatpush1.bf16.msra.mxu0 0
        %1235 = vmatprep.subr.bf16.mxu0 0
        %1236 = vmatpush1.bf16.msra.mxu0 0
        %1237 = vmatprep.subr.bf16.mxu0 0
        %1238 = vmatpush1.bf16.msra.mxu0 0
        %1239 = vmatprep.subr.bf16.mxu0 0
        %1240 = vmatpush1.bf16.msra.mxu0 0
        %1241 = vmatprep.subr.bf16.mxu0 0
        %1242 = vmatpush1.bf16.msra.mxu0 0
        %1243 = vmatprep.mubr.bf16.mxu0 0
        %1244 = vmatmul.mubr.bf16.gmra.mrb[0].mxu0 %v1206
        %v1245 = vpop.f32.mrb[0].mxu0
        %v1246 = vadd.f32 0.0, %v1245
        %v1247 = vpop.f32.mrb[0].mxu0
        %v1248 = vpop.f32.mrb[0].mxu0
        %v1249 = vpop.f32.mrb[0].mxu0
        %1250 = vdwg.mxu0
        %1251 = vst.msk [vmem:[#allocation2] sm:$0xff] %vm829, %v1108
        %1253 = vrot.lane.b32.xlu0 %v1154, 8
        %v1254 = vpop.permute.xlu0 %1253
        %vm1256 = vcmask 130112
        %1257 = vst.msk [vmem:[#allocation2] sm:$0xff] %vm1256, %v1254
        %1259 = vrot.lane.b32.xlu0 %v1200, 16
        %v1260 = vpop.permute.xlu0 %1259
        %vm1262 = vcmask 195712
        %1263 = vst.msk [vmem:[#allocation2] sm:$0xff] %vm1262, %v1260
        %1265 = vrot.lane.b32.xlu0 %v1246, 24
        %v1266 = vpop.permute.xlu0 %1265
        %vm1268 = vcmask 261312
        %1269 = vst.msk [vmem:[#allocation2] sm:$0xff] %vm1268, %v1266
        %v1270 = vld [vmem:[#allocation2] sm:$0xff]
        %v1271 = vpack.c.bf16 %v1270, %v1270
        %v1272 = vld [vmem:[%s9] sm:$0xf]
        %v1273 = vld [vmem:[%s9 + $0x4] sm:$0xf]
        %v1274 = vld [vmem:[%s9 + $0x8] sm:$0xf]
        %v1275 = vld [vmem:[%s9 + $0xc] sm:$0xf]
        %v1276 = vld [vmem:[%s10] sm:$0x1]
        %v1278 = vlaneseq
        %v1279 = vshrl.u32 %v1278, 7
        %v1280 = vsub.s32 0, %v1279
        %v1281 = vrot.slane %v1276, %v1280
        %v1287 = vunpack.c.l.b16 %v1272
        %v1288 = vunpack.c.l.b16 %v1273
        %v1289 = vunpack.c.l.b16 %v1274
        %v1290 = vunpack.c.l.b16 %v1275
        %v1291 = vpack.c.b16 %v1288, %v1287
        %v1292 = vpack.c.b16 %v1290, %v1289
        %v1294 = vsel %vm597, %v1271, 0
        %v1297 = vsel %vm597, %v1291, 0
        %v1300 = vsel %vm597, %v1292, 0
        %1302 = vmatprep.subr.bf16.mxu0 0
        %1303 = vmatpush1.bf16.xpose.msra.mxu0 %v1297
        %1304 = vmatprep.subr.bf16.mxu0 0
        %1305 = vmatpush1.bf16.xpose.msra.mxu0 %v1300
        %1306 = vmatprep.subr.bf16.mxu0 0
        %1307 = vmatpush1.bf16.xpose.msra.mxu0 0
        %1308 = vmatprep.subr.bf16.mxu0 0
        %1309 = vmatpush1.bf16.xpose.msra.mxu0 0
        %1310 = vmatprep.subr.bf16.mxu0 0
        %1311 = vmatpush1.bf16.xpose.msra.mxu0 0
        %1312 = vmatprep.subr.bf16.mxu0 0
        %1313 = vmatpush1.bf16.xpose.msra.mxu0 0
        %1314 = vmatprep.subr.bf16.mxu0 0
        %1315 = vmatpush1.bf16.xpose.msra.mxu0 0
        %1316 = vmatprep.subr.bf16.mxu0 0
        %1317 = vmatpush1.bf16.xpose.msra.mxu0 0
        %1318 = vmatprep.subr.bf16.mxu0 0
        %1319 = vmatpush1.bf16.xpose.msra.mxu0 0
        %1320 = vmatprep.subr.bf16.mxu0 0
        %1321 = vmatpush1.bf16.xpose.msra.mxu0 0
        %1322 = vmatprep.subr.bf16.mxu0 0
        %1323 = vmatpush1.bf16.xpose.msra.mxu0 0
        %1324 = vmatprep.subr.bf16.mxu0 0
        %1325 = vmatpush1.bf16.xpose.msra.mxu0 0
        %1326 = vmatprep.subr.bf16.mxu0 0
        %1327 = vmatpush1.bf16.xpose.msra.mxu0 0
        %1328 = vmatprep.subr.bf16.mxu0 0
        %1329 = vmatpush1.bf16.xpose.msra.mxu0 0
        %1330 = vmatprep.subr.bf16.mxu0 0
        %1331 = vmatpush1.bf16.xpose.msra.mxu0 0
        %1332 = vmatprep.subr.bf16.mxu0 0
        %1333 = vmatpush1.bf16.xpose.msra.mxu0 0
        %1334 = vmatprep.mubr.bf16.mxu0 0
        %1335 = vmatmul.mubr.bf16.gmra.mrb[0].mxu0 %v1294
        %v1336 = vpop.f32.mrb[0].mxu0
        %v1337 = vadd.f32 %v1281, %v1336
        %v1338 = vpop.f32.mrb[0].mxu0
        %v1339 = vpop.f32.mrb[0].mxu0
        %v1340 = vpop.f32.mrb[0].mxu0
        %1341 = vdwg.mxu0
        %v1342 = vadd.f32 %v570, %v1337
        %v1343 = vsel %vm597, %v1342, 0.0
        %1344 = vadd.xlane.f32.xlu0 %v1343
        %v1345 = vpop.xlane.xlu0 %1344
        %v1346 = vrcp.pop 32.0
        %v1347 = vmul.f32 %v1345, %v1346
        %v1348 = vsub.f32 %v1342, %v1347
        %v1349 = vmul.f32 %v1348, %v1348
        %v1350 = vsel %vm597, %v1349, 0.0
        %1351 = vadd.xlane.f32.xlu0 %v1350
        %v1352 = vpop.xlane.xlu0 %1351
        %v1353 = vmul.f32 %v1352, %v1346
        %v1354 = vadd.f32 %v1353, 1e-05
        %v1355 = vrsqrt.pop %v1354
        %v1356 = vmul.f32 %v1348, %v1355
        %v1357 = vld [vmem:[%s11] sm:$0x1]
        %v1359 = vlaneseq
        %v1360 = vshrl.u32 %v1359, 7
        %v1361 = vsub.s32 0, %v1360
        %v1362 = vrot.slane %v1357, %v1361
        %v1364 = vmul.f32 %v1356, %v1362
        %v1365 = vld [vmem:[%s12] sm:$0x1]
        %v1367 = vlaneseq
        %v1368 = vshrl.u32 %v1367, 7
        %v1369 = vsub.s32 0, %v1368
        %v1370 = vrot.slane %v1365, %v1369
        %v1372 = vadd.f32 %v1364, %v1370
        %1373 = vst.msk [vmem:[%s568] sm:$0xff] %vm597, %v1372
        %s1374 = sand.u32 %s331, 1
        %s1375 = scalar_lea.sflag [#allocation5], %s1374
        %s1376 = sand.u32 %s331, 1
        %s1377 = smul.addr %s1376, 8
        %s1378 = scalar_lea.vmem [#allocation14], %s1377
        // Predicated region
        $region97: #{tpu_custom_call.1} parent=71 // pred_check
          %p1379 = pneg %p341
        $region98: #{tpu_custom_call.1} parent=71 // pred_check_branch
          %1381 = sbr.rel (%p1379) target = $region100
        $region99: #{tpu_custom_call.1} parent=71 // pred_region
          %s1383 = ssub.s32 128, 128
          %1384 = vsyncadd %s1375, %s1383
          %s1385 = smul.addr %s35, 128
          %s1386 = scalar_lea.hbm %s13, %s1385
          %s1388 = sshll.u32 %s1378, 4
          %s1389 = int_to_ptr.vmem [resolvable:$true] %s1388
          %1391 = dma.vmem_to_hbm [thread:$0]  %s1389, 128, %s1386, %s1375
        $region100: #{tpu_custom_call.1} parent=71 // pred_fallthru
          _
      $region72: #{tpu_custom_call.1} parent=5 // pred_fallthru
        _
      %p1392 = scmp.le.s32.totalorder 2, %s30
      // Predicated region
      $region101: #{tpu_custom_call.1} parent=5 // pred_check
        %p1393 = pneg %p1392
      $region102: #{tpu_custom_call.1} parent=5 // pred_check_branch
        %1395 = sbr.rel (%p1393) target = $region104
      $region103: #{tpu_custom_call.1} parent=5 // pred_region
        %s1396 = ssub.s32 %s30, 2
        // Predicated region
        $region105: #{tpu_custom_call.1} parent=103 // pred_check
          %p1397 = pneg %p347
        $region106: #{tpu_custom_call.1} parent=103 // pred_check_branch
          %1399 = sbr.rel (%p1397) target = $region108
        $region107: #{tpu_custom_call.1} parent=103 // pred_region
          %s1400 = sand.u32 %s332, 1
          %s1401 = scalar_lea.sflag [#allocation5], %s1400
          %s1402 = sand.u32 %s332, 1
          %s1403 = smul.addr %s1402, 8
          %s1404 = scalar_lea.vmem [#allocation14], %s1403
          %1405 = dma.done %s1401, 128
        $region108: #{tpu_custom_call.1} parent=103 // pred_fallthru
          _
      $region104: #{tpu_custom_call.1} parent=5 // pred_fallthru
        _
    $region6: #{tpu_custom_call.1} parent=1 // loop_footer
      %s34 = sadd.s32 1, %s30
    $region7: #{tpu_custom_call.1} parent=1 // loop_footer_branch
      %29 = sbr.rel target = $region3
    $region8: #{tpu_custom_call.1} parent=1 // loop_exit
      _
    %1406 = vsyncpa [#allocation4], 1
    %s1407 = scalar_lea.sflag [#allocation4], 1
    %1408 = vsyncpa %s1407, 1
    %1409 = vsyncpa [#allocation7], 1
    %s1410 = scalar_lea.sflag [#allocation7], 1
    %1411 = vsyncpa %s1410, 1
    %1412 = vsyncpa [#allocation10], 1
    %1413 = vsyncpa [#allocation13], 1
    %1414 = vsyncpa [#allocation5], 1
    %s1415 = scalar_lea.sflag [#allocation5], 1
    %1416 = vsyncpa %s1415, 1

</llo_original>
